<compile_context>
chip_gen: v6e
topology: v6e:2x2x1
jax: 0.10.0
libtpu: 0.0.40
codegen_flags: <defaults>
</compile_context>

<pallas_src>
import jax
import jax.numpy as jnp
from jax.experimental import pallas as pl
from jax.experimental.pallas import tpu as pltpu

D_IN = 6144     # Linear(6144, 512)
D_H = 512       # hidden width
D_OUT = 1       # Linear(512, 1)
TK = 3072       # K-tile for the first (large) matmul; 6144 / 3072 = 2 steps
N_SPLIT = 2     # shard W1's output columns; "parallel" axis -> 2 TCs on v7x


def mlp_kernel(x_ref, w1_ref, b1_ref, w23_ref, out_ref, acc_ref):
    k = pl.program_id(1)

    @pl.when(k == 0)
    def _():
        acc_ref[...] = jnp.zeros_like(acc_ref)

    # Accumulate this N-half of the first matmul over the K (6144) dimension.
    # bf16 x bf16 on the MXU, f32 accumulation.
    acc_ref[...] += jnp.dot(x_ref[...], w1_ref[...],
                            preferred_element_type=jnp.float32)

    @pl.when(k == pl.num_programs(1) - 1)
    def _():
        # Linear(6144,512) bias + Sigmoid for this 256-wide half (f32 bias add).
        h1 = jax.nn.sigmoid(acc_ref[...] + b1_ref[...])
        # Folded Linear(512,512)+Linear(512,1) against this half of (W2@W3):
        # VPU multiply + lane reduction (an N=1 MXU matmul would waste the MXU).
        y = jnp.sum(h1 * w23_ref[...], axis=-1, keepdims=True)   # (B, 1) partial
        out_ref[...] = y[None].astype(out_ref.dtype)             # (1, B, 1)


def pack_params(params):
    """One-time parameter packing. Run OUTSIDE the hot path.

    Stores W1 in bf16 (halves the dominant HBM stream) and folds the two
    trailing linear layers (no nonlinearity between them):
        y = h1 @ (W2 @ W3) + (b2 @ W3 + b3)
    """
    w1, b1, w2, b2, w3, b3 = params
    w1_bf16 = w1.astype(jnp.bfloat16)
    w23_t = (w2 @ w3).T          # (1, D_H), pre-transposed for lane-wise multiply
    b23 = b2 @ w3 + b3           # (1, 1)
    return (w1_bf16, b1, w23_t, b23)


@jax.jit
def net_forward(x, packed):
    w1_bf16, b1, w23_t, b23 = packed
    B = x.shape[0]

    # Fixed-config guards (shapes are static under jit; fail loudly if changed).
    assert x.shape[1] == D_IN, "x feature dim must be 6144"
    assert D_IN % TK == 0, "TK must divide D_IN"
    assert D_H % N_SPLIT == 0, "N_SPLIT must divide D_H"

    # x is tiny (B x 6144 x 2B); casting it here is negligible traffic.
    x_bf16 = x.astype(jnp.bfloat16)

    n_k = D_IN // TK
    d_hn = D_H // N_SPLIT

    bytes_accessed = (x_bf16.size * 2 + w1_bf16.size * 2
                      + b1.size * 4 + w23_t.size * 4 + N_SPLIT * B * D_OUT * 4)
    cost = pl.CostEstimate(
        flops=2 * B * D_IN * D_H,
        transcendentals=B * D_H,          # sigmoid
        bytes_accessed=bytes_accessed,
    )

    parts = pl.pallas_call(
        mlp_kernel,
        out_shape=jax.ShapeDtypeStruct((N_SPLIT, B, D_OUT), jnp.float32),
        grid_spec=pltpu.PrefetchScalarGridSpec(
            num_scalar_prefetch=0,
            grid=(N_SPLIT, n_k),
            in_specs=[
                pl.BlockSpec((B, TK), lambda j, k: (0, k)),       # x K-tile (bf16)
                pl.BlockSpec((TK, d_hn), lambda j, k: (k, j)),    # W1 K/N tile (bf16)
                pl.BlockSpec((1, d_hn), lambda j, k: (0, j)),     # b1 half (f32)
                pl.BlockSpec((1, d_hn), lambda j, k: (0, j)),     # (W2@W3)^T half (f32)
            ],
            out_specs=pl.BlockSpec((1, B, D_OUT), lambda j, k: (j, 0, 0)),
            scratch_shapes=[pltpu.VMEM((B, d_hn), jnp.float32)],
        ),
        compiler_params=pltpu.CompilerParams(
            # N halves are independent -> "parallel" (megacore on v7x);
            # K accumulation is a reduction -> "arbitrary".
            dimension_semantics=("parallel", "arbitrary"),
            # Per-core footprint ~3.3 MiB (double-buffered bf16 W1 half-tiles
            # dominate); 20 MiB leaves headroom and is legal on v5e/v6e/v7x.
            vmem_limit_bytes=20 << 20,
        ),
        cost_estimate=cost,
    )(x_bf16, w1_bf16, b1, w23_t)

    # Combine the two N-halves and add the folded tail bias (tiny XLA op).
    return jnp.sum(parts, axis=0) + b23


def init_params(key):
    """Deterministic init mimicking PyTorch's default U(-1/sqrt(fan_in), +)."""
    ks = jax.random.split(key, 6)

    def lin(kw, kb, fan_in, fan_out):
        bound = 1.0 / jnp.sqrt(fan_in)
        w = jax.random.uniform(kw, (fan_in, fan_out), jnp.float32, -bound, bound)
        b = jax.random.uniform(kb, (1, fan_out), jnp.float32, -bound, bound)
        return w, b

    w1, b1 = lin(ks[0], ks[1], D_IN, D_H)
    w2, b2 = lin(ks[2], ks[3], D_H, D_H)
    w3, b3 = lin(ks[4], ks[5], D_H, D_OUT)
    return (w1, b1, w2, b2, w3, b3)


def net_reference(x, params):
    """Exact f32 module semantics."""
    w1, b1, w2, b2, w3, b3 = params
    h = jax.nn.sigmoid(x @ w1 + b1)
    h = h @ w2 + b2
    return h @ w3 + b3


def net_reference_bf16(x, params):
    """Mirrors the kernel's numerics: bf16 streaming of x/W1, f32 accumulate."""
    w1, b1, w2, b2, w3, b3 = params
    h = jax.nn.sigmoid(
        jnp.dot(x.astype(jnp.bfloat16), w1.astype(jnp.bfloat16),
                preferred_element_type=jnp.float32) + b1)
    h = h @ w2 + b2
    return h @ w3 + b3


if __name__ == "__main__":
    key = jax.random.PRNGKey(0)
    k_x, k_p = jax.random.split(key)
    B = 8
    x = jax.random.normal(k_x, (B, D_IN), jnp.float32)
    params = init_params(k_p)

    # One-time packing (bf16 W1 + folded tail) -- kept out of the hot path.
    packed = jax.tree_util.tree_map(jax.block_until_ready, pack_params(params))

    out = jax.block_until_ready(net_forward(x, packed))
    assert out.shape == (B, D_OUT)

    # Tight check against a reference using the same bf16 streaming numerics.
    ref_bf16 = net_reference_bf16(x, params)
    assert jnp.allclose(out, ref_bf16, atol=1e-3, rtol=1e-3)

    # Loose sanity check against the exact f32 module math (bf16 weight
    # quantization introduces small, benign differences).
    ref_f32 = net_reference(x, params)
    assert jnp.allclose(out, ref_f32, atol=5e-2, rtol=5e-2)

    print("KERNEL_OK")
</pallas_src>

<mosaic_0001>
module attributes {stable_mosaic.version = 11 : i64} {
  func.func @mlp_kernel(%arg0: i32, %arg1: i32, %arg2: memref<8x3072xbf16, #tpu.memory_space<vmem>>, %arg3: memref<3072x256xbf16, #tpu.memory_space<vmem>>, %arg4: memref<1x256xf32, #tpu.memory_space<vmem>>, %arg5: memref<1x256xf32, #tpu.memory_space<vmem>>, %arg6: memref<1x8x1xf32, #tpu.memory_space<vmem>>, %arg7: memref<8x256xf32, #tpu.memory_space<vmem>>) attributes {dimension_semantics = [#tpu.dimension_semantics<parallel>, #tpu.dimension_semantics<arbitrary>], iteration_bounds = array<i64: 2, 2>, scalar_prefetch = 0 : i64, scratch_operands = 1 : i64, tpu.core_type = #tpu.core_type<tc>, window_params = [{transform_indices = @transform_0, window_bounds = array<i64: 8, 3072>}, {transform_indices = @transform_1, window_bounds = array<i64: 3072, 256>}, {transform_indices = @transform_2, window_bounds = array<i64: 1, 256>}, {transform_indices = @transform_3, window_bounds = array<i64: 1, 256>}, {transform_indices = @transform_4, window_bounds = array<i64: 1, 8, 1>}]} {
    %c0_i32 = arith.constant 0 : i32
    %0 = arith.cmpi eq, %arg1, %c0_i32 : i32
    %1 = arith.extui %0 : i1 to i32
    %c0_i32_0 = arith.constant 0 : i32
    %2 = arith.cmpi ne, %1, %c0_i32_0 : i32
    scf.if %2 {
      %cst_9 = arith.constant 0.000000e+00 : f32
      %12 = vector.broadcast %cst_9 : f32 to vector<8x256xf32>
      %c0_10 = arith.constant 0 : index
      %c0_11 = arith.constant 0 : index
      %13 = vector.load %arg7[%c0_10, %c0_11] : memref<8x256xf32, #tpu.memory_space<vmem>>, vector<8x256xf32>
      tpu.vector_store %arg7[%c0_10, %c0_11], %12 {strides = array<i32>} : memref<8x256xf32, #tpu.memory_space<vmem>>, vector<8x256xf32>,
    } else {
    }
    %c0 = arith.constant 0 : index
    %c0_1 = arith.constant 0 : index
    %3 = vector.load %arg7[%c0, %c0_1] : memref<8x256xf32, #tpu.memory_space<vmem>>, vector<8x256xf32>
    %c0_2 = arith.constant 0 : index
    %c0_3 = arith.constant 0 : index
    %4 = vector.load %arg2[%c0_2, %c0_3] : memref<8x3072xbf16, #tpu.memory_space<vmem>>, vector<8x3072xbf16>
    %c0_4 = arith.constant 0 : index
    %c0_5 = arith.constant 0 : index
    %5 = vector.load %arg3[%c0_4, %c0_5] : memref<3072x256xbf16, #tpu.memory_space<vmem>>, vector<3072x256xbf16>
    %cst = arith.constant dense<0.000000e+00> : vector<8x256xf32>
    %6 = tpu.matmul %4, %5, %cst {dimension_numbers = #tpu.dot_dimension_numbers<[1], [0], [0], [1], [0, 0, 1, 1], [], []>} : vector<8x3072xbf16>, vector<3072x256xbf16>, vector<8x256xf32> -> vector<8x256xf32>
    %7 = arith.addf %3, %6 : vector<8x256xf32>
    %c0_6 = arith.constant 0 : index
    %c0_7 = arith.constant 0 : index
    %8 = vector.load %arg7[%c0_6, %c0_7] : memref<8x256xf32, #tpu.memory_space<vmem>>, vector<8x256xf32>
    tpu.vector_store %arg7[%c0_6, %c0_7], %7 {strides = array<i32>} : memref<8x256xf32, #tpu.memory_space<vmem>>, vector<8x256xf32>,
    %c1_i32 = arith.constant 1 : i32
    %9 = arith.cmpi eq, %arg1, %c1_i32 : i32
    %10 = arith.extui %9 : i1 to i32
    %c0_i32_8 = arith.constant 0 : i32
    %11 = arith.cmpi ne, %10, %c0_i32_8 : i32
    scf.if %11 {
      %c0_9 = arith.constant 0 : index
      %c0_10 = arith.constant 0 : index
      %12 = vector.load %arg7[%c0_9, %c0_10] : memref<8x256xf32, #tpu.memory_space<vmem>>, vector<8x256xf32>
      %c0_11 = arith.constant 0 : index
      %c0_12 = arith.constant 0 : index
      %13 = vector.load %arg4[%c0_11, %c0_12] : memref<1x256xf32, #tpu.memory_space<vmem>>, vector<1x256xf32>
      %14 = vector.broadcast %13 : vector<1x256xf32> to vector<8x256xf32>
      %15 = arith.addf %12, %14 : vector<8x256xf32>
      %16 = arith.negf %15 : vector<8x256xf32>
      %17 = math.exp %16 : vector<8x256xf32>
      %cst_13 = arith.constant 1.000000e+00 : f32
      %18 = vector.broadcast %cst_13 : f32 to vector<8x256xf32>
      %19 = arith.addf %18, %17 : vector<8x256xf32>
      %20 = arith.divf %18, %19 : vector<8x256xf32>
      %c0_14 = arith.constant 0 : index
      %c0_15 = arith.constant 0 : index
      %21 = vector.load %arg5[%c0_14, %c0_15] : memref<1x256xf32, #tpu.memory_space<vmem>>, vector<1x256xf32>
      %22 = vector.broadcast %21 : vector<1x256xf32> to vector<8x256xf32>
      %23 = arith.mulf %20, %22 : vector<8x256xf32>
      %cst_16 = arith.constant dense<0.000000e+00> : vector<8xf32>
      %24 = vector.multi_reduction <add>, %23, %cst_16 [1] : vector<8x256xf32> to vector<8xf32>
      %25 = vector.shape_cast %24 : vector<8xf32> to vector<8x1xf32>
      %26 = vector.shape_cast %25 : vector<8x1xf32> to vector<1x8x1xf32>
      %c0_17 = arith.constant 0 : index
      %c0_18 = arith.constant 0 : index
      %c0_19 = arith.constant 0 : index
      %27 = vector.load %arg6[%c0_17, %c0_18, %c0_19] : memref<1x8x1xf32, #tpu.memory_space<vmem>>, vector<1x8x1xf32>
      tpu.vector_store %arg6[%c0_17, %c0_18, %c0_19], %26 {strides = array<i32>} : memref<1x8x1xf32, #tpu.memory_space<vmem>>, vector<1x8x1xf32>,
    } else {
    }
    return
  }
  func.func @transform_0(%arg0: i32, %arg1: i32) -> (i32, i32) {
    %c0_i32 = arith.constant 0 : i32
    %c0_i32_0 = arith.constant 0 : i32
    return %c0_i32, %arg1 : i32, i32
  }
  func.func @transform_1(%arg0: i32, %arg1: i32) -> (i32, i32) {
    %c0_i32 = arith.constant 0 : i32
    return %arg1, %arg0 : i32, i32
  }
  func.func @transform_2(%arg0: i32, %arg1: i32) -> (i32, i32) {
    %c0_i32 = arith.constant 0 : i32
    %c0_i32_0 = arith.constant 0 : i32
    return %c0_i32, %arg0 : i32, i32
  }
  func.func @transform_3(%arg0: i32, %arg1: i32) -> (i32, i32) {
    %c0_i32 = arith.constant 0 : i32
    %c0_i32_0 = arith.constant 0 : i32
    return %c0_i32, %arg0 : i32, i32
  }
  func.func @transform_4(%arg0: i32, %arg1: i32) -> (i32, i32, i32) {
    %c0_i32 = arith.constant 0 : i32
    %c0_i32_0 = arith.constant 0 : i32
    %c0_i32_1 = arith.constant 0 : i32
    return %arg0, %c0_i32, %c0_i32_0 : i32, i32, i32
  }
}

</mosaic_0001>

<llo_original>
// kernel: net_forward.1
$region0: #{net_forward.1}
  #allocation0 [shape = 'u32[]', space=smem, size = 0x4, offset = 0x4, fixed_abs, tag = 'smem constant byte address 0x4 - core index']
  #allocation1 [shape = 'u32[144,128]{1,0:T(1,128)}', space=vmem, size = 0x12000, scoped, tag = 'internal scratch']
  #allocation2 [shape = 'f32[8,256]{1,0:T(8,128)}', space=vmem, size = 0x2000, scoped, tag = 'scratch operand']
  %s0 = inlined_call_operand.vmem [shape: bf16[8,6144], index: 0, kind: input, shape index: {}]
  %s1 = inlined_call_operand.hbm [shape: bf16[6144,512], index: 1, kind: input, shape index: {}]
  %s2 = inlined_call_operand.hbm [shape: f32[1,512], index: 2, kind: input, shape index: {}]
  %s3 = inlined_call_operand.hbm [shape: f32[1,512], index: 3, kind: input, shape index: {}]
  %s4 = inlined_call_operand.vmem [shape: f32[2,8,1], index: 4, kind: output, shape index: {}]
  %s5 = sld [smem:[#allocation0]]
  $region69: #{net_forward.1} parent=0
    _
  %s7 = ssub.s32 1, %s5
  %s8 = scalar_select 0, %s7, %s5
  $region1: #{net_forward.1} parent=0
    #allocation3 [shape = 'u8[3145728]{0}', space=vmem, size = 0x300000, scoped, tag = 'input window, operand 1']
    #allocation4 [shape = 's32[2]{0}', space=sflag, size = 0x8, scoped, tag = 'scoped memory for net_forward.1']
    #allocation5 [shape = 'u8[2048]{0}', space=vmem, size = 0x800, scoped, tag = 'input window, operand 2']
    #allocation6 [shape = 's32[2]{0}', space=sflag, size = 0x8, scoped, tag = 'scoped memory for net_forward.1']
    #allocation7 [shape = 'u8[2048]{0}', space=vmem, size = 0x800, scoped, tag = 'input window, operand 3']
    %9 = vsyncpa [#allocation4], 0
    %s10 = scalar_lea.sflag [#allocation4], 1
    %11 = vsyncpa %s10, 0
    %12 = vsyncpa [#allocation6], 0
    %s13 = scalar_lea.sflag [#allocation6], 1
    %14 = vsyncpa %s13, 0
    loop: start=0, step=1, limit=6
    $region2: #{net_forward.1} parent=1 // loop_pre_header
      _
    $region3: #{net_forward.1} parent=1 // loop_header
      %s16 = sphi 0, %s20
      %p17 = scmp.ge.s32.totalorder %s16, 6
      %s23 = sphi 0, %s35
      %s24 = sphi 0, %s31
      %s25 = sphi 0, %s23
      %s26 = sphi 0, %s24
      %s27 = sphi 0, %s25
      %s28 = sphi 0, %s26
      %s38 = sphi 0, %s40
      %s41 = sphi 0, %s38
      %s42 = sphi 0, %s41
      %s58 = sphi 0, %s42
      %s66 = sphi 0, %s68
      %s69 = sphi 0, %s66
      %s70 = sphi 0, %s69
      %s86 = sphi 0, %s70
      %s92 = sphi 0, %s94
      %s95 = sphi 0, %s92
      %s96 = sphi 0, %s95
      %s112 = sphi 0, %s96
      %s118 = sphi 0, %s120
      %s121 = sphi 0, %s118
      %s122 = sphi 0, %s121
      %s138 = sphi 0, %s122
      %s144 = sphi 0, %s146
      %s147 = sphi 0, %s144
      %s148 = sphi 0, %s147
      %s164 = sphi 0, %s148
    $region4: #{net_forward.1} parent=1 // loop_header_branch
      %19 = sbr.rel (%p17) target = $region8
    $region5: #{net_forward.1} parent=1 // loop_body
      %s21 = ssub.s32 %s16, 1
      %s22 = ssub.s32 %s16, 2
      %s29 = sadd.s32 1, %s24
      %p30 = scmp.ge.s32.totalorder %s29, 2
      %s31 = scalar_select %p30, 0, %s29
      %s32 = sadd.s32 1, %s23
      %s33 = scalar_select %p30, %s32, %s23
      %p34 = scmp.ge.s32.totalorder %s33, 2
      %s35 = scalar_select %p34, 0, %s33
      %s36 = ssub.s32 %s24, %s31
      %p37 = scmp.eq.s32.totalorder %s36, 0
      %s39 = sadd.s32 %s38, 1
      %s40 = scalar_select %p37, %s38, %s39
      %p43 = pneg %p37
      %p44 = scmp.eq.s32.totalorder %s16, 3
      %p45 = por %p43, %p44
      %p46 = scmp.ne.s32.totalorder %s38, %s41
      %p47 = scmp.eq.s32.totalorder %s16, 0
      %p48 = por %p46, %p47
      %p49 = scmp.ne.s32.totalorder %s38, %s41
      %p50 = scmp.eq.s32.totalorder %s21, 3
      %p51 = por %p49, %p50
      %p52 = scmp.ne.s32.totalorder %s41, %s42
      %p53 = scmp.eq.s32.totalorder %s21, 0
      %p54 = por %p52, %p53
      %p55 = scmp.ne.s32.totalorder %s41, %s42
      %p56 = scmp.eq.s32.totalorder %s22, 3
      %p57 = por %p55, %p56
      %p59 = scmp.ne.s32.totalorder %s42, %s58
      %p60 = scmp.eq.s32.totalorder %s22, 0
      %p61 = por %p59, %p60
      %s62 = ssub.s32 %s24, %s31
      %s63 = ssub.s32 %s23, %s35
      %s64 = sor.u32 %s62, %s63
      %p65 = scmp.eq.s32.totalorder %s64, 0
      %s67 = sadd.s32 %s66, 1
      %s68 = scalar_select %p65, %s66, %s67
      %p71 = pneg %p65
      %p72 = scmp.eq.s32.totalorder %s16, 3
      %p73 = por %p71, %p72
      %p74 = scmp.ne.s32.totalorder %s66, %s69
      %p75 = scmp.eq.s32.totalorder %s16, 0
      %p76 = por %p74, %p75
      %p77 = scmp.ne.s32.totalorder %s66, %s69
      %p78 = scmp.eq.s32.totalorder %s21, 3
      %p79 = por %p77, %p78
      %p80 = scmp.ne.s32.totalorder %s69, %s70
      %p81 = scmp.eq.s32.totalorder %s21, 0
      %p82 = por %p80, %p81
      %p83 = scmp.ne.s32.totalorder %s69, %s70
      %p84 = scmp.eq.s32.totalorder %s22, 3
      %p85 = por %p83, %p84
      %p87 = scmp.ne.s32.totalorder %s70, %s86
      %p88 = scmp.eq.s32.totalorder %s22, 0
      %p89 = por %p87, %p88
      %s90 = ssub.s32 %s23, %s35
      %p91 = scmp.eq.s32.totalorder %s90, 0
      %s93 = sadd.s32 %s92, 1
      %s94 = scalar_select %p91, %s92, %s93
      %p97 = pneg %p91
      %p98 = scmp.eq.s32.totalorder %s16, 3
      %p99 = por %p97, %p98
      %p100 = scmp.ne.s32.totalorder %s92, %s95
      %p101 = scmp.eq.s32.totalorder %s16, 0
      %p102 = por %p100, %p101
      %p103 = scmp.ne.s32.totalorder %s92, %s95
      %p104 = scmp.eq.s32.totalorder %s21, 3
      %p105 = por %p103, %p104
      %p106 = scmp.ne.s32.totalorder %s95, %s96
      %p107 = scmp.eq.s32.totalorder %s21, 0
      %p108 = por %p106, %p107
      %p109 = scmp.ne.s32.totalorder %s95, %s96
      %p110 = scmp.eq.s32.totalorder %s22, 3
      %p111 = por %p109, %p110
      %p113 = scmp.ne.s32.totalorder %s96, %s112
      %p114 = scmp.eq.s32.totalorder %s22, 0
      %p115 = por %p113, %p114
      %s116 = ssub.s32 %s23, %s35
      %p117 = scmp.eq.s32.totalorder %s116, 0
      %s119 = sadd.s32 %s118, 1
      %s120 = scalar_select %p117, %s118, %s119
      %p123 = pneg %p117
      %p124 = scmp.eq.s32.totalorder %s16, 3
      %p125 = por %p123, %p124
      %p126 = scmp.ne.s32.totalorder %s118, %s121
      %p127 = scmp.eq.s32.totalorder %s16, 0
      %p128 = por %p126, %p127
      %p129 = scmp.ne.s32.totalorder %s118, %s121
      %p130 = scmp.eq.s32.totalorder %s21, 3
      %p131 = por %p129, %p130
      %p132 = scmp.ne.s32.totalorder %s121, %s122
      %p133 = scmp.eq.s32.totalorder %s21, 0
      %p134 = por %p132, %p133
      %p135 = scmp.ne.s32.totalorder %s121, %s122
      %p136 = scmp.eq.s32.totalorder %s22, 3
      %p137 = por %p135, %p136
      %p139 = scmp.ne.s32.totalorder %s122, %s138
      %p140 = scmp.eq.s32.totalorder %s22, 0
      %p141 = por %p139, %p140
      %s142 = ssub.s32 %s23, %s35
      %p143 = scmp.eq.s32.totalorder %s142, 0
      %s145 = sadd.s32 %s144, 1
      %s146 = scalar_select %p143, %s144, %s145
      %p149 = pneg %p143
      %p150 = scmp.eq.s32.totalorder %s16, 3
      %p151 = por %p149, %p150
      %p152 = scmp.ne.s32.totalorder %s144, %s147
      %p153 = scmp.eq.s32.totalorder %s16, 0
      %p154 = por %p152, %p153
      %p155 = scmp.ne.s32.totalorder %s144, %s147
      %p156 = scmp.eq.s32.totalorder %s21, 3
      %p157 = por %p155, %p156
      %p158 = scmp.ne.s32.totalorder %s147, %s148
      %p159 = scmp.eq.s32.totalorder %s21, 0
      %p160 = por %p158, %p159
      %p161 = scmp.ne.s32.totalorder %s147, %s148
      %p162 = scmp.eq.s32.totalorder %s22, 3
      %p163 = por %p161, %p162
      %p165 = scmp.ne.s32.totalorder %s148, %s164
      %p166 = scmp.eq.s32.totalorder %s22, 0
      %p167 = por %p165, %p166
      %p168 = scmp.le.s32.totalorder 1, %s16
      %p169 = scmp.lt.s32.totalorder %s16, 5
      %p170 = pnand %p168, %p169
      %p171 = pneg %p170
      // Predicated region
      $region9: #{net_forward.1} parent=5 // pred_check
        _
      $region10: #{net_forward.1} parent=5 // pred_check_branch
        %173 = sbr.rel (%p170) target = $region12
      $region11: #{net_forward.1} parent=5 // pred_region
        %s174 = ssub.s32 %s16, 1
      $region12: #{net_forward.1} parent=5 // pred_fallthru
        _
      %p175 = scmp.lt.s32.totalorder %s16, 4
      // Predicated region
      $region13: #{net_forward.1} parent=5 // pred_check
        %p176 = pneg %p175
      $region14: #{net_forward.1} parent=5 // pred_check_branch
        %178 = sbr.rel (%p176) target = $region16
      $region15: #{net_forward.1} parent=5 // pred_region
        // Predicated region
        $region17: #{net_forward.1} parent=15 // pred_check
          %p179 = pneg %p48
        $region18: #{net_forward.1} parent=15 // pred_check_branch
          %181 = sbr.rel (%p179) target = $region20
        $region19: #{net_forward.1} parent=15 // pred_region
          %s182 = smul.u32 24, %s24
          %p183 = scmp.lt.s32.totalorder %s182, 47
          %s184 = scalar_select %p183, %s182, 47
          %s185 = smul.addr %s184, 4
          %s186 = scalar_lea.vmem %s0, %s185
          %s187 = smul.u32 24, %s24
        $region20: #{net_forward.1} parent=15 // pred_fallthru
          _
        // Predicated region
        $region21: #{net_forward.1} parent=15 // pred_check
          %p188 = pneg %p76
        $region22: #{net_forward.1} parent=15 // pred_check_branch
          %190 = sbr.rel (%p188) target = $region24
        $region23: #{net_forward.1} parent=15 // pred_region
          %s191 = sand.u32 %s66, 1
          %s192 = scalar_lea.sflag [#allocation4], %s191
          %s193 = sand.u32 %s66, 1
          %s194 = smul.addr %s193, 3072
          %s195 = scalar_lea.vmem [#allocation3], %s194
          %s196 = smul.u32 384, %s24
          %s197 = smul.u32 2, %s23
          %s199 = ssub.s32 49152, 49152
          %200 = vsyncadd %s192, %s199
          %s201 = smul.addr %s196, 4
          %s202 = sadd.s32 %s197, %s201
          %s203 = smul.addr %s202, 64
          %s204 = scalar_lea.hbm %s1, %s203
          %s205 = sshll.u32 %s195, 4
          %s206 = int_to_ptr.vmem [resolvable:$true] %s205
          %211 = dma.hbm_to_vmem [thread:$0]  %s204, 49152, %s206, %s192, 256, 128, 8
        $region24: #{net_forward.1} parent=15 // pred_fallthru
          _
        // Predicated region
        $region25: #{net_forward.1} parent=15 // pred_check
          %p212 = pneg %p102
        $region26: #{net_forward.1} parent=15 // pred_check_branch
          %214 = sbr.rel (%p212) target = $region28
        $region27: #{net_forward.1} parent=15 // pred_region
          %s215 = sand.u32 %s16, 1
          %s216 = scalar_lea.sflag [#allocation6], %s215
          %s217 = sand.u32 %s92, 1
          %s218 = smul.addr %s217, 2
          %s219 = scalar_lea.vmem [#allocation5], %s218
          %s220 = smul.u32 2, %s23
          %s222 = ssub.s32 32, 32
          %223 = vsyncadd %s216, %s222
          %s224 = smul.addr %s220, 16
          %s225 = scalar_lea.hbm %s2, %s224
          %s227 = sshll.u32 %s219, 4
          %s228 = int_to_ptr.vmem [resolvable:$true] %s227
          %230 = dma.hbm_to_vmem [thread:$0]  %s225, 32, %s228, %s216
        $region28: #{net_forward.1} parent=15 // pred_fallthru
          _
        // Predicated region
        $region29: #{net_forward.1} parent=15 // pred_check
          %p231 = pneg %p128
        $region30: #{net_forward.1} parent=15 // pred_check_branch
          %233 = sbr.rel (%p231) target = $region32
        $region31: #{net_forward.1} parent=15 // pred_region
          %s234 = sand.u32 %s16, 1
          %s235 = scalar_lea.sflag [#allocation6], %s234
          %s236 = sand.u32 %s118, 1
          %s237 = smul.addr %s236, 2
          %s238 = scalar_lea.vmem [#allocation7], %s237
          %s239 = smul.u32 2, %s23
          %s241 = ssub.s32 32, 32
          %242 = vsyncadd %s235, %s241
          %s243 = smul.addr %s239, 16
          %s244 = scalar_lea.hbm %s3, %s243
          %s246 = sshll.u32 %s238, 4
          %s247 = int_to_ptr.vmem [resolvable:$true] %s246
          %249 = dma.hbm_to_vmem [thread:$0]  %s244, 32, %s247, %s235
        $region32: #{net_forward.1} parent=15 // pred_fallthru
          _
      $region16: #{net_forward.1} parent=5 // pred_fallthru
        _
      %p250 = scmp.le.s32.totalorder 1, %s16
      %p251 = scmp.lt.s32.totalorder %s16, 5
      %p252 = pnand %p250, %p251
      %p253 = pneg %p252
      // Predicated region
      $region33: #{net_forward.1} parent=5 // pred_check
        _
      $region34: #{net_forward.1} parent=5 // pred_check_branch
        %255 = sbr.rel (%p252) target = $region36
      $region35: #{net_forward.1} parent=5 // pred_region
        %s256 = ssub.s32 %s16, 1
        %s257 = sand.u32 %s69, 1
        %s258 = scalar_lea.sflag [#allocation4], %s257
        %s259 = sand.u32 %s69, 1
        %s260 = smul.addr %s259, 3072
        %s261 = scalar_lea.vmem [#allocation3], %s260
        // Predicated region
        $region37: #{net_forward.1} parent=35 // pred_check
          %p262 = pneg %p82
        $region38: #{net_forward.1} parent=35 // pred_check_branch
          %264 = sbr.rel (%p262) target = $region40
        $region39: #{net_forward.1} parent=35 // pred_region
          %265 = dma.done %s258, 49152
        $region40: #{net_forward.1} parent=35 // pred_fallthru
          _
        %s266 = sand.u32 %s21, 1
        %s267 = scalar_lea.sflag [#allocation6], %s266
        %s268 = sand.u32 %s95, 1
        %s269 = smul.addr %s268, 2
        %s270 = scalar_lea.vmem [#allocation5], %s269
        // Predicated region
        $region41: #{net_forward.1} parent=35 // pred_check
          %p271 = pneg %p108
        $region42: #{net_forward.1} parent=35 // pred_check_branch
          %273 = sbr.rel (%p271) target = $region44
        $region43: #{net_forward.1} parent=35 // pred_region
          %274 = dma.done %s267, 32
        $region44: #{net_forward.1} parent=35 // pred_fallthru
          _
        %s275 = sand.u32 %s21, 1
        %s276 = scalar_lea.sflag [#allocation6], %s275
        %s277 = sand.u32 %s121, 1
        %s278 = smul.addr %s277, 2
        %s279 = scalar_lea.vmem [#allocation7], %s278
        // Predicated region
        $region45: #{net_forward.1} parent=35 // pred_check
          %p280 = pneg %p134
        $region46: #{net_forward.1} parent=35 // pred_check_branch
          %282 = sbr.rel (%p280) target = $region48
        $region47: #{net_forward.1} parent=35 // pred_region
          %283 = dma.done %s276, 32
        $region48: #{net_forward.1} parent=35 // pred_fallthru
          _
        %s284 = smul.u32 24, %s26
        %p285 = scmp.lt.s32.totalorder %s284, 47
        %s286 = scalar_select %p285, %s284, 47
        %s287 = smul.addr %s286, 4
        %s288 = scalar_lea.vmem %s0, %s287
        %p289 = pneg %p54
        %p290 = pneg %p51
        %s291 = sand.u32 %s69, 1
        %s292 = scalar_lea.sflag [#allocation4], %s291
        %s293 = sand.u32 %s69, 1
        %s294 = smul.addr %s293, 3072
        %s295 = scalar_lea.vmem [#allocation3], %s294
        %p296 = pneg %p82
        %p297 = pneg %p79
        %s298 = sand.u32 %s21, 1
        %s299 = scalar_lea.sflag [#allocation6], %s298
        %s300 = sand.u32 %s95, 1
        %s301 = smul.addr %s300, 2
        %s302 = scalar_lea.vmem [#allocation5], %s301
        %p303 = pneg %p108
        %p304 = pneg %p105
        %s305 = sand.u32 %s21, 1
        %s306 = scalar_lea.sflag [#allocation6], %s305
        %s307 = sand.u32 %s121, 1
        %s308 = smul.addr %s307, 2
        %s309 = scalar_lea.vmem [#allocation7], %s308
        %p310 = pneg %p134
        %p311 = pneg %p131
        %p312 = pneg %p160
        %p313 = pneg %p157
        %p314 = scmp.lt.s32.totalorder %s25, 1
        %s315 = scalar_select %p314, %s25, 1
        %s316 = smul.addr %s315, 8
        %s317 = scalar_lea.vmem %s4, %s316
        %s318 = smul.u32 24, %s26
        %p319 = scmp.lt.s32.totalorder %s318, 47
        %s320 = scalar_select %p319, %s318, 47
        %s321 = smul.addr %s320, 4
        %s322 = scalar_lea.vmem %s0, %s321
        %s323 = smul.u32 24, %s26
        %s324 = smul.u32 384, %s26
        %s325 = smul.u32 2, %s25
        %s326 = smul.u32 2, %s25
        %s327 = smul.u32 2, %s25
        %p328 = scmp.lt.s32.totalorder %s25, 1
        %s329 = scalar_select %p328, %s25, 1
        %s330 = smul.addr %s329, 8
        %s331 = scalar_lea.vmem %s4, %s330
        %p332 = scmp.eq.s32.totalorder %s26, 0
        // Predicated region
        $region49: #{net_forward.1} parent=35 // pred_check
          %p333 = pneg %p332
        $region50: #{net_forward.1} parent=35 // pred_check_branch
          %335 = sbr.rel (%p333) target = $region52
        $region51: #{net_forward.1} parent=35 // pred_region
          %336 = vst [vmem:[#allocation2] sm:$0xff] 0.0
          %337 = vst [vmem:[#allocation2 + $0x8] sm:$0xff] 0.0
        $region52: #{net_forward.1} parent=35 // pred_fallthru
          _
        %v338 = vld [vmem:[#allocation2] sm:$0xff]
        %v339 = vld [vmem:[#allocation2 + $0x8] sm:$0xff]
        %v340 = vld [vmem:[%s322] sm:$0xff]
        %v341 = vld [vmem:[%s322 + $0x8] sm:$0xff]
        %v342 = vld [vmem:[%s322 + $0x10] sm:$0xff]
        %v343 = vld [vmem:[%s322 + $0x18] sm:$0xff]
        %v344 = vld [vmem:[%s322 + $0x20] sm:$0xff]
        %v345 = vld [vmem:[%s322 + $0x28] sm:$0xff]
        %v346 = vld [vmem:[%s322 + $0x30] sm:$0xff]
        %v347 = vld [vmem:[%s322 + $0x38] sm:$0xff]
        %v348 = vld [vmem:[%s322 + $0x40] sm:$0xff]
        %v349 = vld [vmem:[%s322 + $0x48] sm:$0xff]
        %v350 = vld [vmem:[%s322 + $0x50] sm:$0xff]
        %v351 = vld [vmem:[%s322 + $0x58] sm:$0xff]
        %v352 = vld [vmem:[%s261] sm:$0xff]
        %v353 = vld [vmem:[%s261 + $0x8] sm:$0xff]
        %v354 = vld [vmem:[%s261 + $0x10] sm:$0xff]
        %v355 = vld [vmem:[%s261 + $0x18] sm:$0xff]
        %v356 = vld [vmem:[%s261 + $0x20] sm:$0xff]
        %v357 = vld [vmem:[%s261 + $0x28] sm:$0xff]
        %v358 = vld [vmem:[%s261 + $0x30] sm:$0xff]
        %v359 = vld [vmem:[%s261 + $0x38] sm:$0xff]
        %v360 = vld [vmem:[%s261 + $0x40] sm:$0xff]
        %v361 = vld [vmem:[%s261 + $0x48] sm:$0xff]
        %v362 = vld [vmem:[%s261 + $0x50] sm:$0xff]
        %v363 = vld [vmem:[%s261 + $0x58] sm:$0xff]
        %v364 = vld [vmem:[%s261 + $0x60] sm:$0xff]
        %v365 = vld [vmem:[%s261 + $0x68] sm:$0xff]
        %v366 = vld [vmem:[%s261 + $0x70] sm:$0xff]
        %v367 = vld [vmem:[%s261 + $0x78] sm:$0xff]
        %v368 = vld [vmem:[%s261 + $0x80] sm:$0xff]
        %v369 = vld [vmem:[%s261 + $0x88] sm:$0xff]
        %v370 = vld [vmem:[%s261 + $0x90] sm:$0xff]
        %v371 = vld [vmem:[%s261 + $0x98] sm:$0xff]
        %v372 = vld [vmem:[%s261 + $0xa0] sm:$0xff]
        %v373 = vld [vmem:[%s261 + $0xa8] sm:$0xff]
        %v374 = vld [vmem:[%s261 + $0xb0] sm:$0xff]
        %v375 = vld [vmem:[%s261 + $0xb8] sm:$0xff]
        %v376 = vld [vmem:[%s261 + $0xc0] sm:$0xff]
        %v377 = vld [vmem:[%s261 + $0xc8] sm:$0xff]
        %v378 = vld [vmem:[%s261 + $0xd0] sm:$0xff]
        %v379 = vld [vmem:[%s261 + $0xd8] sm:$0xff]
        %v380 = vld [vmem:[%s261 + $0xe0] sm:$0xff]
        %v381 = vld [vmem:[%s261 + $0xe8] sm:$0xff]
        %v382 = vld [vmem:[%s261 + $0xf0] sm:$0xff]
        %v383 = vld [vmem:[%s261 + $0xf8] sm:$0xff]
        %v384 = vld [vmem:[%s261 + $0x100] sm:$0xff]
        %v385 = vld [vmem:[%s261 + $0x108] sm:$0xff]
        %v386 = vld [vmem:[%s261 + $0x110] sm:$0xff]
        %v387 = vld [vmem:[%s261 + $0x118] sm:$0xff]
        %v388 = vld [vmem:[%s261 + $0x120] sm:$0xff]
        %v389 = vld [vmem:[%s261 + $0x128] sm:$0xff]
        %v390 = vld [vmem:[%s261 + $0x130] sm:$0xff]
        %v391 = vld [vmem:[%s261 + $0x138] sm:$0xff]
        %v392 = vld [vmem:[%s261 + $0x140] sm:$0xff]
        %v393 = vld [vmem:[%s261 + $0x148] sm:$0xff]
        %v394 = vld [vmem:[%s261 + $0x150] sm:$0xff]
        %v395 = vld [vmem:[%s261 + $0x158] sm:$0xff]
        %v396 = vld [vmem:[%s261 + $0x160] sm:$0xff]
        %v397 = vld [vmem:[%s261 + $0x168] sm:$0xff]
        %v398 = vld [vmem:[%s261 + $0x170] sm:$0xff]
        %v399 = vld [vmem:[%s261 + $0x178] sm:$0xff]
        %v400 = vld [vmem:[%s261 + $0x180] sm:$0xff]
        %v401 = vld [vmem:[%s261 + $0x188] sm:$0xff]
        %v402 = vld [vmem:[%s261 + $0x190] sm:$0xff]
        %v403 = vld [vmem:[%s261 + $0x198] sm:$0xff]
        %v404 = vld [vmem:[%s261 + $0x1a0] sm:$0xff]
        %v405 = vld [vmem:[%s261 + $0x1a8] sm:$0xff]
        %v406 = vld [vmem:[%s261 + $0x1b0] sm:$0xff]
        %v407 = vld [vmem:[%s261 + $0x1b8] sm:$0xff]
        %v408 = vld [vmem:[%s261 + $0x1c0] sm:$0xff]
        %v409 = vld [vmem:[%s261 + $0x1c8] sm:$0xff]
        %v410 = vld [vmem:[%s261 + $0x1d0] sm:$0xff]
        %v411 = vld [vmem:[%s261 + $0x1d8] sm:$0xff]
        %v412 = vld [vmem:[%s261 + $0x1e0] sm:$0xff]
        %v413 = vld [vmem:[%s261 + $0x1e8] sm:$0xff]
        %v414 = vld [vmem:[%s261 + $0x1f0] sm:$0xff]
        %v415 = vld [vmem:[%s261 + $0x1f8] sm:$0xff]
        %v416 = vld [vmem:[%s261 + $0x200] sm:$0xff]
        %v417 = vld [vmem:[%s261 + $0x208] sm:$0xff]
        %v418 = vld [vmem:[%s261 + $0x210] sm:$0xff]
        %v419 = vld [vmem:[%s261 + $0x218] sm:$0xff]
        %v420 = vld [vmem:[%s261 + $0x220] sm:$0xff]
        %v421 = vld [vmem:[%s261 + $0x228] sm:$0xff]
        %v422 = vld [vmem:[%s261 + $0x230] sm:$0xff]
        %v423 = vld [vmem:[%s261 + $0x238] sm:$0xff]
        %v424 = vld [vmem:[%s261 + $0x240] sm:$0xff]
        %v425 = vld [vmem:[%s261 + $0x248] sm:$0xff]
        %v426 = vld [vmem:[%s261 + $0x250] sm:$0xff]
        %v427 = vld [vmem:[%s261 + $0x258] sm:$0xff]
        %v428 = vld [vmem:[%s261 + $0x260] sm:$0xff]
        %v429 = vld [vmem:[%s261 + $0x268] sm:$0xff]
        %v430 = vld [vmem:[%s261 + $0x270] sm:$0xff]
        %v431 = vld [vmem:[%s261 + $0x278] sm:$0xff]
        %v432 = vld [vmem:[%s261 + $0x280] sm:$0xff]
        %v433 = vld [vmem:[%s261 + $0x288] sm:$0xff]
        %v434 = vld [vmem:[%s261 + $0x290] sm:$0xff]
        %v435 = vld [vmem:[%s261 + $0x298] sm:$0xff]
        %v436 = vld [vmem:[%s261 + $0x2a0] sm:$0xff]
        %v437 = vld [vmem:[%s261 + $0x2a8] sm:$0xff]
        %v438 = vld [vmem:[%s261 + $0x2b0] sm:$0xff]
        %v439 = vld [vmem:[%s261 + $0x2b8] sm:$0xff]
        %v440 = vld [vmem:[%s261 + $0x2c0] sm:$0xff]
        %v441 = vld [vmem:[%s261 + $0x2c8] sm:$0xff]
        %v442 = vld [vmem:[%s261 + $0x2d0] sm:$0xff]
        %v443 = vld [vmem:[%s261 + $0x2d8] sm:$0xff]
        %v444 = vld [vmem:[%s261 + $0x2e0] sm:$0xff]
        %v445 = vld [vmem:[%s261 + $0x2e8] sm:$0xff]
        %v446 = vld [vmem:[%s261 + $0x2f0] sm:$0xff]
        %v447 = vld [vmem:[%s261 + $0x2f8] sm:$0xff]
        %v448 = vld [vmem:[%s261 + $0x300] sm:$0xff]
        %v449 = vld [vmem:[%s261 + $0x308] sm:$0xff]
        %v450 = vld [vmem:[%s261 + $0x310] sm:$0xff]
        %v451 = vld [vmem:[%s261 + $0x318] sm:$0xff]
        %v452 = vld [vmem:[%s261 + $0x320] sm:$0xff]
        %v453 = vld [vmem:[%s261 + $0x328] sm:$0xff]
        %v454 = vld [vmem:[%s261 + $0x330] sm:$0xff]
        %v455 = vld [vmem:[%s261 + $0x338] sm:$0xff]
        %v456 = vld [vmem:[%s261 + $0x340] sm:$0xff]
        %v457 = vld [vmem:[%s261 + $0x348] sm:$0xff]
        %v458 = vld [vmem:[%s261 + $0x350] sm:$0xff]
        %v459 = vld [vmem:[%s261 + $0x358] sm:$0xff]
        %v460 = vld [vmem:[%s261 + $0x360] sm:$0xff]
        %v461 = vld [vmem:[%s261 + $0x368] sm:$0xff]
        %v462 = vld [vmem:[%s261 + $0x370] sm:$0xff]
        %v463 = vld [vmem:[%s261 + $0x378] sm:$0xff]
        %v464 = vld [vmem:[%s261 + $0x380] sm:$0xff]
        %v465 = vld [vmem:[%s261 + $0x388] sm:$0xff]
        %v466 = vld [vmem:[%s261 + $0x390] sm:$0xff]
        %v467 = vld [vmem:[%s261 + $0x398] sm:$0xff]
        %v468 = vld [vmem:[%s261 + $0x3a0] sm:$0xff]
        %v469 = vld [vmem:[%s261 + $0x3a8] sm:$0xff]
        %v470 = vld [vmem:[%s261 + $0x3b0] sm:$0xff]
        %v471 = vld [vmem:[%s261 + $0x3b8] sm:$0xff]
        %v472 = vld [vmem:[%s261 + $0x3c0] sm:$0xff]
        %v473 = vld [vmem:[%s261 + $0x3c8] sm:$0xff]
        %v474 = vld [vmem:[%s261 + $0x3d0] sm:$0xff]
        %v475 = vld [vmem:[%s261 + $0x3d8] sm:$0xff]
        %v476 = vld [vmem:[%s261 + $0x3e0] sm:$0xff]
        %v477 = vld [vmem:[%s261 + $0x3e8] sm:$0xff]
        %v478 = vld [vmem:[%s261 + $0x3f0] sm:$0xff]
        %v479 = vld [vmem:[%s261 + $0x3f8] sm:$0xff]
        %v480 = vld [vmem:[%s261 + $0x400] sm:$0xff]
        %v481 = vld [vmem:[%s261 + $0x408] sm:$0xff]
        %v482 = vld [vmem:[%s261 + $0x410] sm:$0xff]
        %v483 = vld [vmem:[%s261 + $0x418] sm:$0xff]
        %v484 = vld [vmem:[%s261 + $0x420] sm:$0xff]
        %v485 = vld [vmem:[%s261 + $0x428] sm:$0xff]
        %v486 = vld [vmem:[%s261 + $0x430] sm:$0xff]
        %v487 = vld [vmem:[%s261 + $0x438] sm:$0xff]
        %v488 = vld [vmem:[%s261 + $0x440] sm:$0xff]
        %v489 = vld [vmem:[%s261 + $0x448] sm:$0xff]
        %v490 = vld [vmem:[%s261 + $0x450] sm:$0xff]
        %v491 = vld [vmem:[%s261 + $0x458] sm:$0xff]
        %v492 = vld [vmem:[%s261 + $0x460] sm:$0xff]
        %v493 = vld [vmem:[%s261 + $0x468] sm:$0xff]
        %v494 = vld [vmem:[%s261 + $0x470] sm:$0xff]
        %v495 = vld [vmem:[%s261 + $0x478] sm:$0xff]
        %v496 = vld [vmem:[%s261 + $0x480] sm:$0xff]
        %v497 = vld [vmem:[%s261 + $0x488] sm:$0xff]
        %v498 = vld [vmem:[%s261 + $0x490] sm:$0xff]
        %v499 = vld [vmem:[%s261 + $0x498] sm:$0xff]
        %v500 = vld [vmem:[%s261 + $0x4a0] sm:$0xff]
        %v501 = vld [vmem:[%s261 + $0x4a8] sm:$0xff]
        %v502 = vld [vmem:[%s261 + $0x4b0] sm:$0xff]
        %v503 = vld [vmem:[%s261 + $0x4b8] sm:$0xff]
        %v504 = vld [vmem:[%s261 + $0x4c0] sm:$0xff]
        %v505 = vld [vmem:[%s261 + $0x4c8] sm:$0xff]
        %v506 = vld [vmem:[%s261 + $0x4d0] sm:$0xff]
        %v507 = vld [vmem:[%s261 + $0x4d8] sm:$0xff]
        %v508 = vld [vmem:[%s261 + $0x4e0] sm:$0xff]
        %v509 = vld [vmem:[%s261 + $0x4e8] sm:$0xff]
        %v510 = vld [vmem:[%s261 + $0x4f0] sm:$0xff]
        %v511 = vld [vmem:[%s261 + $0x4f8] sm:$0xff]
        %v512 = vld [vmem:[%s261 + $0x500] sm:$0xff]
        %v513 = vld [vmem:[%s261 + $0x508] sm:$0xff]
        %v514 = vld [vmem:[%s261 + $0x510] sm:$0xff]
        %v515 = vld [vmem:[%s261 + $0x518] sm:$0xff]
        %v516 = vld [vmem:[%s261 + $0x520] sm:$0xff]
        %v517 = vld [vmem:[%s261 + $0x528] sm:$0xff]
        %v518 = vld [vmem:[%s261 + $0x530] sm:$0xff]
        %v519 = vld [vmem:[%s261 + $0x538] sm:$0xff]
        %v520 = vld [vmem:[%s261 + $0x540] sm:$0xff]
        %v521 = vld [vmem:[%s261 + $0x548] sm:$0xff]
        %v522 = vld [vmem:[%s261 + $0x550] sm:$0xff]
        %v523 = vld [vmem:[%s261 + $0x558] sm:$0xff]
        %v524 = vld [vmem:[%s261 + $0x560] sm:$0xff]
        %v525 = vld [vmem:[%s261 + $0x568] sm:$0xff]
        %v526 = vld [vmem:[%s261 + $0x570] sm:$0xff]
        %v527 = vld [vmem:[%s261 + $0x578] sm:$0xff]
        %v528 = vld [vmem:[%s261 + $0x580] sm:$0xff]
        %v529 = vld [vmem:[%s261 + $0x588] sm:$0xff]
        %v530 = vld [vmem:[%s261 + $0x590] sm:$0xff]
        %v531 = vld [vmem:[%s261 + $0x598] sm:$0xff]
        %v532 = vld [vmem:[%s261 + $0x5a0] sm:$0xff]
        %v533 = vld [vmem:[%s261 + $0x5a8] sm:$0xff]
        %v534 = vld [vmem:[%s261 + $0x5b0] sm:$0xff]
        %v535 = vld [vmem:[%s261 + $0x5b8] sm:$0xff]
        %v536 = vld [vmem:[%s261 + $0x5c0] sm:$0xff]
        %v537 = vld [vmem:[%s261 + $0x5c8] sm:$0xff]
        %v538 = vld [vmem:[%s261 + $0x5d0] sm:$0xff]
        %v539 = vld [vmem:[%s261 + $0x5d8] sm:$0xff]
        %v540 = vld [vmem:[%s261 + $0x5e0] sm:$0xff]
        %v541 = vld [vmem:[%s261 + $0x5e8] sm:$0xff]
        %v542 = vld [vmem:[%s261 + $0x5f0] sm:$0xff]
        %v543 = vld [vmem:[%s261 + $0x5f8] sm:$0xff]
        %v544 = vld [vmem:[%s261 + $0x600] sm:$0xff]
        %v545 = vld [vmem:[%s261 + $0x608] sm:$0xff]
        %v546 = vld [vmem:[%s261 + $0x610] sm:$0xff]
        %v547 = vld [vmem:[%s261 + $0x618] sm:$0xff]
        %v548 = vld [vmem:[%s261 + $0x620] sm:$0xff]
        %v549 = vld [vmem:[%s261 + $0x628] sm:$0xff]
        %v550 = vld [vmem:[%s261 + $0x630] sm:$0xff]
        %v551 = vld [vmem:[%s261 + $0x638] sm:$0xff]
        %v552 = vld [vmem:[%s261 + $0x640] sm:$0xff]
        %v553 = vld [vmem:[%s261 + $0x648] sm:$0xff]
        %v554 = vld [vmem:[%s261 + $0x650] sm:$0xff]
        %v555 = vld [vmem:[%s261 + $0x658] sm:$0xff]
        %v556 = vld [vmem:[%s261 + $0x660] sm:$0xff]
        %v557 = vld [vmem:[%s261 + $0x668] sm:$0xff]
        %v558 = vld [vmem:[%s261 + $0x670] sm:$0xff]
        %v559 = vld [vmem:[%s261 + $0x678] sm:$0xff]
        %v560 = vld [vmem:[%s261 + $0x680] sm:$0xff]
        %v561 = vld [vmem:[%s261 + $0x688] sm:$0xff]
        %v562 = vld [vmem:[%s261 + $0x690] sm:$0xff]
        %v563 = vld [vmem:[%s261 + $0x698] sm:$0xff]
        %v564 = vld [vmem:[%s261 + $0x6a0] sm:$0xff]
        %v565 = vld [vmem:[%s261 + $0x6a8] sm:$0xff]
        %v566 = vld [vmem:[%s261 + $0x6b0] sm:$0xff]
        %v567 = vld [vmem:[%s261 + $0x6b8] sm:$0xff]
        %v568 = vld [vmem:[%s261 + $0x6c0] sm:$0xff]
        %v569 = vld [vmem:[%s261 + $0x6c8] sm:$0xff]
        %v570 = vld [vmem:[%s261 + $0x6d0] sm:$0xff]
        %v571 = vld [vmem:[%s261 + $0x6d8] sm:$0xff]
        %v572 = vld [vmem:[%s261 + $0x6e0] sm:$0xff]
        %v573 = vld [vmem:[%s261 + $0x6e8] sm:$0xff]
        %v574 = vld [vmem:[%s261 + $0x6f0] sm:$0xff]
        %v575 = vld [vmem:[%s261 + $0x6f8] sm:$0xff]
        %v576 = vld [vmem:[%s261 + $0x700] sm:$0xff]
        %v577 = vld [vmem:[%s261 + $0x708] sm:$0xff]
        %v578 = vld [vmem:[%s261 + $0x710] sm:$0xff]
        %v579 = vld [vmem:[%s261 + $0x718] sm:$0xff]
        %v580 = vld [vmem:[%s261 + $0x720] sm:$0xff]
        %v581 = vld [vmem:[%s261 + $0x728] sm:$0xff]
        %v582 = vld [vmem:[%s261 + $0x730] sm:$0xff]
        %v583 = vld [vmem:[%s261 + $0x738] sm:$0xff]
        %v584 = vld [vmem:[%s261 + $0x740] sm:$0xff]
        %v585 = vld [vmem:[%s261 + $0x748] sm:$0xff]
        %v586 = vld [vmem:[%s261 + $0x750] sm:$0xff]
        %v587 = vld [vmem:[%s261 + $0x758] sm:$0xff]
        %v588 = vld [vmem:[%s261 + $0x760] sm:$0xff]
        %v589 = vld [vmem:[%s261 + $0x768] sm:$0xff]
        %v590 = vld [vmem:[%s261 + $0x770] sm:$0xff]
        %v591 = vld [vmem:[%s261 + $0x778] sm:$0xff]
        %v592 = vld [vmem:[%s261 + $0x780] sm:$0xff]
        %v593 = vld [vmem:[%s261 + $0x788] sm:$0xff]
        %v594 = vld [vmem:[%s261 + $0x790] sm:$0xff]
        %v595 = vld [vmem:[%s261 + $0x798] sm:$0xff]
        %v596 = vld [vmem:[%s261 + $0x7a0] sm:$0xff]
        %v597 = vld [vmem:[%s261 + $0x7a8] sm:$0xff]
        %v598 = vld [vmem:[%s261 + $0x7b0] sm:$0xff]
        %v599 = vld [vmem:[%s261 + $0x7b8] sm:$0xff]
        %v600 = vld [vmem:[%s261 + $0x7c0] sm:$0xff]
        %v601 = vld [vmem:[%s261 + $0x7c8] sm:$0xff]
        %v602 = vld [vmem:[%s261 + $0x7d0] sm:$0xff]
        %v603 = vld [vmem:[%s261 + $0x7d8] sm:$0xff]
        %v604 = vld [vmem:[%s261 + $0x7e0] sm:$0xff]
        %v605 = vld [vmem:[%s261 + $0x7e8] sm:$0xff]
        %v606 = vld [vmem:[%s261 + $0x7f0] sm:$0xff]
        %v607 = vld [vmem:[%s261 + $0x7f8] sm:$0xff]
        %v608 = vld [vmem:[%s261 + $0x800] sm:$0xff]
        %v609 = vld [vmem:[%s261 + $0x808] sm:$0xff]
        %v610 = vld [vmem:[%s261 + $0x810] sm:$0xff]
        %v611 = vld [vmem:[%s261 + $0x818] sm:$0xff]
        %v612 = vld [vmem:[%s261 + $0x820] sm:$0xff]
        %v613 = vld [vmem:[%s261 + $0x828] sm:$0xff]
        %v614 = vld [vmem:[%s261 + $0x830] sm:$0xff]
        %v615 = vld [vmem:[%s261 + $0x838] sm:$0xff]
        %v616 = vld [vmem:[%s261 + $0x840] sm:$0xff]
        %v617 = vld [vmem:[%s261 + $0x848] sm:$0xff]
        %v618 = vld [vmem:[%s261 + $0x850] sm:$0xff]
        %v619 = vld [vmem:[%s261 + $0x858] sm:$0xff]
        %v620 = vld [vmem:[%s261 + $0x860] sm:$0xff]
        %v621 = vld [vmem:[%s261 + $0x868] sm:$0xff]
        %v622 = vld [vmem:[%s261 + $0x870] sm:$0xff]
        %v623 = vld [vmem:[%s261 + $0x878] sm:$0xff]
        %v624 = vld [vmem:[%s261 + $0x880] sm:$0xff]
        %v625 = vld [vmem:[%s261 + $0x888] sm:$0xff]
        %v626 = vld [vmem:[%s261 + $0x890] sm:$0xff]
        %v627 = vld [vmem:[%s261 + $0x898] sm:$0xff]
        %v628 = vld [vmem:[%s261 + $0x8a0] sm:$0xff]
        %v629 = vld [vmem:[%s261 + $0x8a8] sm:$0xff]
        %v630 = vld [vmem:[%s261 + $0x8b0] sm:$0xff]
        %v631 = vld [vmem:[%s261 + $0x8b8] sm:$0xff]
        %v632 = vld [vmem:[%s261 + $0x8c0] sm:$0xff]
        %v633 = vld [vmem:[%s261 + $0x8c8] sm:$0xff]
        %v634 = vld [vmem:[%s261 + $0x8d0] sm:$0xff]
        %v635 = vld [vmem:[%s261 + $0x8d8] sm:$0xff]
        %v636 = vld [vmem:[%s261 + $0x8e0] sm:$0xff]
        %v637 = vld [vmem:[%s261 + $0x8e8] sm:$0xff]
        %v638 = vld [vmem:[%s261 + $0x8f0] sm:$0xff]
        %v639 = vld [vmem:[%s261 + $0x8f8] sm:$0xff]
        %v640 = vld [vmem:[%s261 + $0x900] sm:$0xff]
        %v641 = vld [vmem:[%s261 + $0x908] sm:$0xff]
        %v642 = vld [vmem:[%s261 + $0x910] sm:$0xff]
        %v643 = vld [vmem:[%s261 + $0x918] sm:$0xff]
        %v644 = vld [vmem:[%s261 + $0x920] sm:$0xff]
        %v645 = vld [vmem:[%s261 + $0x928] sm:$0xff]
        %v646 = vld [vmem:[%s261 + $0x930] sm:$0xff]
        %v647 = vld [vmem:[%s261 + $0x938] sm:$0xff]
        %v648 = vld [vmem:[%s261 + $0x940] sm:$0xff]
        %v649 = vld [vmem:[%s261 + $0x948] sm:$0xff]
        %v650 = vld [vmem:[%s261 + $0x950] sm:$0xff]
        %v651 = vld [vmem:[%s261 + $0x958] sm:$0xff]
        %v652 = vld [vmem:[%s261 + $0x960] sm:$0xff]
        %v653 = vld [vmem:[%s261 + $0x968] sm:$0xff]
        %v654 = vld [vmem:[%s261 + $0x970] sm:$0xff]
        %v655 = vld [vmem:[%s261 + $0x978] sm:$0xff]
        %v656 = vld [vmem:[%s261 + $0x980] sm:$0xff]
        %v657 = vld [vmem:[%s261 + $0x988] sm:$0xff]
        %v658 = vld [vmem:[%s261 + $0x990] sm:$0xff]
        %v659 = vld [vmem:[%s261 + $0x998] sm:$0xff]
        %v660 = vld [vmem:[%s261 + $0x9a0] sm:$0xff]
        %v661 = vld [vmem:[%s261 + $0x9a8] sm:$0xff]
        %v662 = vld [vmem:[%s261 + $0x9b0] sm:$0xff]
        %v663 = vld [vmem:[%s261 + $0x9b8] sm:$0xff]
        %v664 = vld [vmem:[%s261 + $0x9c0] sm:$0xff]
        %v665 = vld [vmem:[%s261 + $0x9c8] sm:$0xff]
        %v666 = vld [vmem:[%s261 + $0x9d0] sm:$0xff]
        %v667 = vld [vmem:[%s261 + $0x9d8] sm:$0xff]
        %v668 = vld [vmem:[%s261 + $0x9e0] sm:$0xff]
        %v669 = vld [vmem:[%s261 + $0x9e8] sm:$0xff]
        %v670 = vld [vmem:[%s261 + $0x9f0] sm:$0xff]
        %v671 = vld [vmem:[%s261 + $0x9f8] sm:$0xff]
        %v672 = vld [vmem:[%s261 + $0xa00] sm:$0xff]
        %v673 = vld [vmem:[%s261 + $0xa08] sm:$0xff]
        %v674 = vld [vmem:[%s261 + $0xa10] sm:$0xff]
        %v675 = vld [vmem:[%s261 + $0xa18] sm:$0xff]
        %v676 = vld [vmem:[%s261 + $0xa20] sm:$0xff]
        %v677 = vld [vmem:[%s261 + $0xa28] sm:$0xff]
        %v678 = vld [vmem:[%s261 + $0xa30] sm:$0xff]
        %v679 = vld [vmem:[%s261 + $0xa38] sm:$0xff]
        %v680 = vld [vmem:[%s261 + $0xa40] sm:$0xff]
        %v681 = vld [vmem:[%s261 + $0xa48] sm:$0xff]
        %v682 = vld [vmem:[%s261 + $0xa50] sm:$0xff]
        %v683 = vld [vmem:[%s261 + $0xa58] sm:$0xff]
        %v684 = vld [vmem:[%s261 + $0xa60] sm:$0xff]
        %v685 = vld [vmem:[%s261 + $0xa68] sm:$0xff]
        %v686 = vld [vmem:[%s261 + $0xa70] sm:$0xff]
        %v687 = vld [vmem:[%s261 + $0xa78] sm:$0xff]
        %v688 = vld [vmem:[%s261 + $0xa80] sm:$0xff]
        %v689 = vld [vmem:[%s261 + $0xa88] sm:$0xff]
        %v690 = vld [vmem:[%s261 + $0xa90] sm:$0xff]
        %v691 = vld [vmem:[%s261 + $0xa98] sm:$0xff]
        %v692 = vld [vmem:[%s261 + $0xaa0] sm:$0xff]
        %v693 = vld [vmem:[%s261 + $0xaa8] sm:$0xff]
        %v694 = vld [vmem:[%s261 + $0xab0] sm:$0xff]
        %v695 = vld [vmem:[%s261 + $0xab8] sm:$0xff]
        %v696 = vld [vmem:[%s261 + $0xac0] sm:$0xff]
        %v697 = vld [vmem:[%s261 + $0xac8] sm:$0xff]
        %v698 = vld [vmem:[%s261 + $0xad0] sm:$0xff]
        %v699 = vld [vmem:[%s261 + $0xad8] sm:$0xff]
        %v700 = vld [vmem:[%s261 + $0xae0] sm:$0xff]
        %v701 = vld [vmem:[%s261 + $0xae8] sm:$0xff]
        %v702 = vld [vmem:[%s261 + $0xaf0] sm:$0xff]
        %v703 = vld [vmem:[%s261 + $0xaf8] sm:$0xff]
        %v704 = vld [vmem:[%s261 + $0xb00] sm:$0xff]
        %v705 = vld [vmem:[%s261 + $0xb08] sm:$0xff]
        %v706 = vld [vmem:[%s261 + $0xb10] sm:$0xff]
        %v707 = vld [vmem:[%s261 + $0xb18] sm:$0xff]
        %v708 = vld [vmem:[%s261 + $0xb20] sm:$0xff]
        %v709 = vld [vmem:[%s261 + $0xb28] sm:$0xff]
        %v710 = vld [vmem:[%s261 + $0xb30] sm:$0xff]
        %v711 = vld [vmem:[%s261 + $0xb38] sm:$0xff]
        %v712 = vld [vmem:[%s261 + $0xb40] sm:$0xff]
        %v713 = vld [vmem:[%s261 + $0xb48] sm:$0xff]
        %v714 = vld [vmem:[%s261 + $0xb50] sm:$0xff]
        %v715 = vld [vmem:[%s261 + $0xb58] sm:$0xff]
        %v716 = vld [vmem:[%s261 + $0xb60] sm:$0xff]
        %v717 = vld [vmem:[%s261 + $0xb68] sm:$0xff]
        %v718 = vld [vmem:[%s261 + $0xb70] sm:$0xff]
        %v719 = vld [vmem:[%s261 + $0xb78] sm:$0xff]
        %v720 = vld [vmem:[%s261 + $0xb80] sm:$0xff]
        %v721 = vld [vmem:[%s261 + $0xb88] sm:$0xff]
        %v722 = vld [vmem:[%s261 + $0xb90] sm:$0xff]
        %v723 = vld [vmem:[%s261 + $0xb98] sm:$0xff]
        %v724 = vld [vmem:[%s261 + $0xba0] sm:$0xff]
        %v725 = vld [vmem:[%s261 + $0xba8] sm:$0xff]
        %v726 = vld [vmem:[%s261 + $0xbb0] sm:$0xff]
        %v727 = vld [vmem:[%s261 + $0xbb8] sm:$0xff]
        %v728 = vld [vmem:[%s261 + $0xbc0] sm:$0xff]
        %v729 = vld [vmem:[%s261 + $0xbc8] sm:$0xff]
        %v730 = vld [vmem:[%s261 + $0xbd0] sm:$0xff]
        %v731 = vld [vmem:[%s261 + $0xbd8] sm:$0xff]
        %v732 = vld [vmem:[%s261 + $0xbe0] sm:$0xff]
        %v733 = vld [vmem:[%s261 + $0xbe8] sm:$0xff]
        %v734 = vld [vmem:[%s261 + $0xbf0] sm:$0xff]
        %v735 = vld [vmem:[%s261 + $0xbf8] sm:$0xff]
        %v748 = vunpack.c.l.b16 %v340
        %v749 = vunpack.c.h.b16 %v340
        %v750 = vunpack.c.l.b16 %v341
        %v751 = vunpack.c.h.b16 %v341
        %v752 = vunpack.c.l.b16 %v342
        %v753 = vunpack.c.h.b16 %v342
        %v754 = vunpack.c.l.b16 %v343
        %v755 = vunpack.c.h.b16 %v343
        %v756 = vunpack.c.l.b16 %v344
        %v757 = vunpack.c.h.b16 %v344
        %v758 = vunpack.c.l.b16 %v345
        %v759 = vunpack.c.h.b16 %v345
        %v760 = vunpack.c.l.b16 %v346
        %v761 = vunpack.c.h.b16 %v346
        %v762 = vunpack.c.l.b16 %v347
        %v763 = vunpack.c.h.b16 %v347
        %v764 = vunpack.c.l.b16 %v348
        %v765 = vunpack.c.h.b16 %v348
        %v766 = vunpack.c.l.b16 %v349
        %v767 = vunpack.c.h.b16 %v349
        %v768 = vunpack.c.l.b16 %v350
        %v769 = vunpack.c.h.b16 %v350
        %v770 = vunpack.c.l.b16 %v351
        %v771 = vunpack.c.h.b16 %v351
        %v772 = vpack.c.b16 %v748, %v748
        %v773 = vpack.c.b16 %v749, %v749
        %v774 = vpack.c.b16 %v750, %v750
        %v775 = vpack.c.b16 %v751, %v751
        %v776 = vpack.c.b16 %v752, %v752
        %v777 = vpack.c.b16 %v753, %v753
        %v778 = vpack.c.b16 %v754, %v754
        %v779 = vpack.c.b16 %v755, %v755
        %v780 = vpack.c.b16 %v756, %v756
        %v781 = vpack.c.b16 %v757, %v757
        %v782 = vpack.c.b16 %v758, %v758
        %v783 = vpack.c.b16 %v759, %v759
        %v784 = vpack.c.b16 %v760, %v760
        %v785 = vpack.c.b16 %v761, %v761
        %v786 = vpack.c.b16 %v762, %v762
        %v787 = vpack.c.b16 %v763, %v763
        %v788 = vpack.c.b16 %v764, %v764
        %v789 = vpack.c.b16 %v765, %v765
        %v790 = vpack.c.b16 %v766, %v766
        %v791 = vpack.c.b16 %v767, %v767
        %v792 = vpack.c.b16 %v768, %v768
        %v793 = vpack.c.b16 %v769, %v769
        %v794 = vpack.c.b16 %v770, %v770
        %v795 = vpack.c.b16 %v771, %v771
        %v1204 = vunpack.c.l.b16 %v352
        %v1205 = vunpack.c.h.b16 %v352
        %v1206 = vunpack.c.l.b16 %v353
        %v1207 = vunpack.c.h.b16 %v353
        %v1208 = vunpack.c.l.b16 %v354
        %v1209 = vunpack.c.h.b16 %v354
        %v1210 = vunpack.c.l.b16 %v355
        %v1211 = vunpack.c.h.b16 %v355
        %v1212 = vunpack.c.l.b16 %v356
        %v1213 = vunpack.c.h.b16 %v356
        %v1214 = vunpack.c.l.b16 %v357
        %v1215 = vunpack.c.h.b16 %v357
        %v1216 = vunpack.c.l.b16 %v358
        %v1217 = vunpack.c.h.b16 %v358
        %v1218 = vunpack.c.l.b16 %v359
        %v1219 = vunpack.c.h.b16 %v359
        %v1220 = vunpack.c.l.b16 %v360
        %v1221 = vunpack.c.h.b16 %v360
        %v1222 = vunpack.c.l.b16 %v361
        %v1223 = vunpack.c.h.b16 %v361
        %v1224 = vunpack.c.l.b16 %v362
        %v1225 = vunpack.c.h.b16 %v362
        %v1226 = vunpack.c.l.b16 %v363
        %v1227 = vunpack.c.h.b16 %v363
        %v1228 = vunpack.c.l.b16 %v364
        %v1229 = vunpack.c.h.b16 %v364
        %v1230 = vunpack.c.l.b16 %v365
        %v1231 = vunpack.c.h.b16 %v365
        %v1232 = vunpack.c.l.b16 %v366
        %v1233 = vunpack.c.h.b16 %v366
        %v1234 = vunpack.c.l.b16 %v367
        %v1235 = vunpack.c.h.b16 %v367
        %v1236 = vunpack.c.l.b16 %v368
        %v1237 = vunpack.c.h.b16 %v368
        %v1238 = vunpack.c.l.b16 %v369
        %v1239 = vunpack.c.h.b16 %v369
        %v1240 = vunpack.c.l.b16 %v370
        %v1241 = vunpack.c.h.b16 %v370
        %v1242 = vunpack.c.l.b16 %v371
        %v1243 = vunpack.c.h.b16 %v371
        %v1244 = vunpack.c.l.b16 %v372
        %v1245 = vunpack.c.h.b16 %v372
        %v1246 = vunpack.c.l.b16 %v373
        %v1247 = vunpack.c.h.b16 %v373
        %v1248 = vunpack.c.l.b16 %v374
        %v1249 = vunpack.c.h.b16 %v374
        %v1250 = vunpack.c.l.b16 %v375
        %v1251 = vunpack.c.h.b16 %v375
        %v1252 = vunpack.c.l.b16 %v376
        %v1253 = vunpack.c.h.b16 %v376
        %v1254 = vunpack.c.l.b16 %v377
        %v1255 = vunpack.c.h.b16 %v377
        %v1256 = vunpack.c.l.b16 %v378
        %v1257 = vunpack.c.h.b16 %v378
        %v1258 = vunpack.c.l.b16 %v379
        %v1259 = vunpack.c.h.b16 %v379
        %v1260 = vunpack.c.l.b16 %v380
        %v1261 = vunpack.c.h.b16 %v380
        %v1262 = vunpack.c.l.b16 %v381
        %v1263 = vunpack.c.h.b16 %v381
        %v1264 = vunpack.c.l.b16 %v382
        %v1265 = vunpack.c.h.b16 %v382
        %v1266 = vunpack.c.l.b16 %v383
        %v1267 = vunpack.c.h.b16 %v383
        %v1268 = vunpack.c.l.b16 %v384
        %v1269 = vunpack.c.h.b16 %v384
        %v1270 = vunpack.c.l.b16 %v385
        %v1271 = vunpack.c.h.b16 %v385
        %v1272 = vunpack.c.l.b16 %v386
        %v1273 = vunpack.c.h.b16 %v386
        %v1274 = vunpack.c.l.b16 %v387
        %v1275 = vunpack.c.h.b16 %v387
        %v1276 = vunpack.c.l.b16 %v388
        %v1277 = vunpack.c.h.b16 %v388
        %v1278 = vunpack.c.l.b16 %v389
        %v1279 = vunpack.c.h.b16 %v389
        %v1280 = vunpack.c.l.b16 %v390
        %v1281 = vunpack.c.h.b16 %v390
        %v1282 = vunpack.c.l.b16 %v391
        %v1283 = vunpack.c.h.b16 %v391
        %v1284 = vunpack.c.l.b16 %v392
        %v1285 = vunpack.c.h.b16 %v392
        %v1286 = vunpack.c.l.b16 %v393
        %v1287 = vunpack.c.h.b16 %v393
        %v1288 = vunpack.c.l.b16 %v394
        %v1289 = vunpack.c.h.b16 %v394
        %v1290 = vunpack.c.l.b16 %v395
        %v1291 = vunpack.c.h.b16 %v395
        %v1292 = vunpack.c.l.b16 %v396
        %v1293 = vunpack.c.h.b16 %v396
        %v1294 = vunpack.c.l.b16 %v397
        %v1295 = vunpack.c.h.b16 %v397
        %v1296 = vunpack.c.l.b16 %v398
        %v1297 = vunpack.c.h.b16 %v398
        %v1298 = vunpack.c.l.b16 %v399
        %v1299 = vunpack.c.h.b16 %v399
        %v1300 = vunpack.c.l.b16 %v400
        %v1301 = vunpack.c.h.b16 %v400
        %v1302 = vunpack.c.l.b16 %v401
        %v1303 = vunpack.c.h.b16 %v401
        %v1304 = vunpack.c.l.b16 %v402
        %v1305 = vunpack.c.h.b16 %v402
        %v1306 = vunpack.c.l.b16 %v403
        %v1307 = vunpack.c.h.b16 %v403
        %v1308 = vunpack.c.l.b16 %v404
        %v1309 = vunpack.c.h.b16 %v404
        %v1310 = vunpack.c.l.b16 %v405
        %v1311 = vunpack.c.h.b16 %v405
        %v1312 = vunpack.c.l.b16 %v406
        %v1313 = vunpack.c.h.b16 %v406
        %v1314 = vunpack.c.l.b16 %v407
        %v1315 = vunpack.c.h.b16 %v407
        %v1316 = vunpack.c.l.b16 %v408
        %v1317 = vunpack.c.h.b16 %v408
        %v1318 = vunpack.c.l.b16 %v409
        %v1319 = vunpack.c.h.b16 %v409
        %v1320 = vunpack.c.l.b16 %v410
        %v1321 = vunpack.c.h.b16 %v410
        %v1322 = vunpack.c.l.b16 %v411
        %v1323 = vunpack.c.h.b16 %v411
        %v1324 = vunpack.c.l.b16 %v412
        %v1325 = vunpack.c.h.b16 %v412
        %v1326 = vunpack.c.l.b16 %v413
        %v1327 = vunpack.c.h.b16 %v413
        %v1328 = vunpack.c.l.b16 %v414
        %v1329 = vunpack.c.h.b16 %v414
        %v1330 = vunpack.c.l.b16 %v415
        %v1331 = vunpack.c.h.b16 %v415
        %v1332 = vunpack.c.l.b16 %v416
        %v1333 = vunpack.c.h.b16 %v416
        %v1334 = vunpack.c.l.b16 %v417
        %v1335 = vunpack.c.h.b16 %v417
        %v1336 = vunpack.c.l.b16 %v418
        %v1337 = vunpack.c.h.b16 %v418
        %v1338 = vunpack.c.l.b16 %v419
        %v1339 = vunpack.c.h.b16 %v419
        %v1340 = vunpack.c.l.b16 %v420
        %v1341 = vunpack.c.h.b16 %v420
        %v1342 = vunpack.c.l.b16 %v421
        %v1343 = vunpack.c.h.b16 %v421
        %v1344 = vunpack.c.l.b16 %v422
        %v1345 = vunpack.c.h.b16 %v422
        %v1346 = vunpack.c.l.b16 %v423
        %v1347 = vunpack.c.h.b16 %v423
        %v1348 = vunpack.c.l.b16 %v424
        %v1349 = vunpack.c.h.b16 %v424
        %v1350 = vunpack.c.l.b16 %v425
        %v1351 = vunpack.c.h.b16 %v425
        %v1352 = vunpack.c.l.b16 %v426
        %v1353 = vunpack.c.h.b16 %v426
        %v1354 = vunpack.c.l.b16 %v427
        %v1355 = vunpack.c.h.b16 %v427
        %v1356 = vunpack.c.l.b16 %v428
        %v1357 = vunpack.c.h.b16 %v428
        %v1358 = vunpack.c.l.b16 %v429
        %v1359 = vunpack.c.h.b16 %v429
        %v1360 = vunpack.c.l.b16 %v430
        %v1361 = vunpack.c.h.b16 %v430
        %v1362 = vunpack.c.l.b16 %v431
        %v1363 = vunpack.c.h.b16 %v431
        %v1364 = vunpack.c.l.b16 %v432
        %v1365 = vunpack.c.h.b16 %v432
        %v1366 = vunpack.c.l.b16 %v433
        %v1367 = vunpack.c.h.b16 %v433
        %v1368 = vunpack.c.l.b16 %v434
        %v1369 = vunpack.c.h.b16 %v434
        %v1370 = vunpack.c.l.b16 %v435
        %v1371 = vunpack.c.h.b16 %v435
        %v1372 = vunpack.c.l.b16 %v436
        %v1373 = vunpack.c.h.b16 %v436
        %v1374 = vunpack.c.l.b16 %v437
        %v1375 = vunpack.c.h.b16 %v437
        %v1376 = vunpack.c.l.b16 %v438
        %v1377 = vunpack.c.h.b16 %v438
        %v1378 = vunpack.c.l.b16 %v439
        %v1379 = vunpack.c.h.b16 %v439
        %v1380 = vunpack.c.l.b16 %v440
        %v1381 = vunpack.c.h.b16 %v440
        %v1382 = vunpack.c.l.b16 %v441
        %v1383 = vunpack.c.h.b16 %v441
        %v1384 = vunpack.c.l.b16 %v442
        %v1385 = vunpack.c.h.b16 %v442
        %v1386 = vunpack.c.l.b16 %v443
        %v1387 = vunpack.c.h.b16 %v443
        %v1388 = vunpack.c.l.b16 %v444
        %v1389 = vunpack.c.h.b16 %v444
        %v1390 = vunpack.c.l.b16 %v445
        %v1391 = vunpack.c.h.b16 %v445
        %v1392 = vunpack.c.l.b16 %v446
        %v1393 = vunpack.c.h.b16 %v446
        %v1394 = vunpack.c.l.b16 %v447
        %v1395 = vunpack.c.h.b16 %v447
        %v1396 = vunpack.c.l.b16 %v448
        %v1397 = vunpack.c.h.b16 %v448
        %v1398 = vunpack.c.l.b16 %v449
        %v1399 = vunpack.c.h.b16 %v449
        %v1400 = vunpack.c.l.b16 %v450
        %v1401 = vunpack.c.h.b16 %v450
        %v1402 = vunpack.c.l.b16 %v451
        %v1403 = vunpack.c.h.b16 %v451
        %v1404 = vunpack.c.l.b16 %v452
        %v1405 = vunpack.c.h.b16 %v452
        %v1406 = vunpack.c.l.b16 %v453
        %v1407 = vunpack.c.h.b16 %v453
        %v1408 = vunpack.c.l.b16 %v454
        %v1409 = vunpack.c.h.b16 %v454
        %v1410 = vunpack.c.l.b16 %v455
        %v1411 = vunpack.c.h.b16 %v455
        %v1412 = vunpack.c.l.b16 %v456
        %v1413 = vunpack.c.h.b16 %v456
        %v1414 = vunpack.c.l.b16 %v457
        %v1415 = vunpack.c.h.b16 %v457
        %v1416 = vunpack.c.l.b16 %v458
        %v1417 = vunpack.c.h.b16 %v458
        %v1418 = vunpack.c.l.b16 %v459
        %v1419 = vunpack.c.h.b16 %v459
        %v1420 = vunpack.c.l.b16 %v460
        %v1421 = vunpack.c.h.b16 %v460
        %v1422 = vunpack.c.l.b16 %v461
        %v1423 = vunpack.c.h.b16 %v461
        %v1424 = vunpack.c.l.b16 %v462
        %v1425 = vunpack.c.h.b16 %v462
        %v1426 = vunpack.c.l.b16 %v463
        %v1427 = vunpack.c.h.b16 %v463
        %v1428 = vunpack.c.l.b16 %v464
        %v1429 = vunpack.c.h.b16 %v464
        %v1430 = vunpack.c.l.b16 %v465
        %v1431 = vunpack.c.h.b16 %v465
        %v1432 = vunpack.c.l.b16 %v466
        %v1433 = vunpack.c.h.b16 %v466
        %v1434 = vunpack.c.l.b16 %v467
        %v1435 = vunpack.c.h.b16 %v467
        %v1436 = vunpack.c.l.b16 %v468
        %v1437 = vunpack.c.h.b16 %v468
        %v1438 = vunpack.c.l.b16 %v469
        %v1439 = vunpack.c.h.b16 %v469
        %v1440 = vunpack.c.l.b16 %v470
        %v1441 = vunpack.c.h.b16 %v470
        %v1442 = vunpack.c.l.b16 %v471
        %v1443 = vunpack.c.h.b16 %v471
        %v1444 = vunpack.c.l.b16 %v472
        %v1445 = vunpack.c.h.b16 %v472
        %v1446 = vunpack.c.l.b16 %v473
        %v1447 = vunpack.c.h.b16 %v473
        %v1448 = vunpack.c.l.b16 %v474
        %v1449 = vunpack.c.h.b16 %v474
        %v1450 = vunpack.c.l.b16 %v475
        %v1451 = vunpack.c.h.b16 %v475
        %v1452 = vunpack.c.l.b16 %v476
        %v1453 = vunpack.c.h.b16 %v476
        %v1454 = vunpack.c.l.b16 %v477
        %v1455 = vunpack.c.h.b16 %v477
        %v1456 = vunpack.c.l.b16 %v478
        %v1457 = vunpack.c.h.b16 %v478
        %v1458 = vunpack.c.l.b16 %v479
        %v1459 = vunpack.c.h.b16 %v479
        %v1460 = vunpack.c.l.b16 %v480
        %v1461 = vunpack.c.h.b16 %v480
        %v1462 = vunpack.c.l.b16 %v481
        %v1463 = vunpack.c.h.b16 %v481
        %v1464 = vunpack.c.l.b16 %v482
        %v1465 = vunpack.c.h.b16 %v482
        %v1466 = vunpack.c.l.b16 %v483
        %v1467 = vunpack.c.h.b16 %v483
        %v1468 = vunpack.c.l.b16 %v484
        %v1469 = vunpack.c.h.b16 %v484
        %v1470 = vunpack.c.l.b16 %v485
        %v1471 = vunpack.c.h.b16 %v485
        %v1472 = vunpack.c.l.b16 %v486
        %v1473 = vunpack.c.h.b16 %v486
        %v1474 = vunpack.c.l.b16 %v487
        %v1475 = vunpack.c.h.b16 %v487
        %v1476 = vunpack.c.l.b16 %v488
        %v1477 = vunpack.c.h.b16 %v488
        %v1478 = vunpack.c.l.b16 %v489
        %v1479 = vunpack.c.h.b16 %v489
        %v1480 = vunpack.c.l.b16 %v490
        %v1481 = vunpack.c.h.b16 %v490
        %v1482 = vunpack.c.l.b16 %v491
        %v1483 = vunpack.c.h.b16 %v491
        %v1484 = vunpack.c.l.b16 %v492
        %v1485 = vunpack.c.h.b16 %v492
        %v1486 = vunpack.c.l.b16 %v493
        %v1487 = vunpack.c.h.b16 %v493
        %v1488 = vunpack.c.l.b16 %v494
        %v1489 = vunpack.c.h.b16 %v494
        %v1490 = vunpack.c.l.b16 %v495
        %v1491 = vunpack.c.h.b16 %v495
        %v1492 = vunpack.c.l.b16 %v496
        %v1493 = vunpack.c.h.b16 %v496
        %v1494 = vunpack.c.l.b16 %v497
        %v1495 = vunpack.c.h.b16 %v497
        %v1496 = vunpack.c.l.b16 %v498
        %v1497 = vunpack.c.h.b16 %v498
        %v1498 = vunpack.c.l.b16 %v499
        %v1499 = vunpack.c.h.b16 %v499
        %v1500 = vunpack.c.l.b16 %v500
        %v1501 = vunpack.c.h.b16 %v500
        %v1502 = vunpack.c.l.b16 %v501
        %v1503 = vunpack.c.h.b16 %v501
        %v1504 = vunpack.c.l.b16 %v502
        %v1505 = vunpack.c.h.b16 %v502
        %v1506 = vunpack.c.l.b16 %v503
        %v1507 = vunpack.c.h.b16 %v503
        %v1508 = vunpack.c.l.b16 %v504
        %v1509 = vunpack.c.h.b16 %v504
        %v1510 = vunpack.c.l.b16 %v505
        %v1511 = vunpack.c.h.b16 %v505
        %v1512 = vunpack.c.l.b16 %v506
        %v1513 = vunpack.c.h.b16 %v506
        %v1514 = vunpack.c.l.b16 %v507
        %v1515 = vunpack.c.h.b16 %v507
        %v1516 = vunpack.c.l.b16 %v508
        %v1517 = vunpack.c.h.b16 %v508
        %v1518 = vunpack.c.l.b16 %v509
        %v1519 = vunpack.c.h.b16 %v509
        %v1520 = vunpack.c.l.b16 %v510
        %v1521 = vunpack.c.h.b16 %v510
        %v1522 = vunpack.c.l.b16 %v511
        %v1523 = vunpack.c.h.b16 %v511
        %v1524 = vunpack.c.l.b16 %v512
        %v1525 = vunpack.c.h.b16 %v512
        %v1526 = vunpack.c.l.b16 %v513
        %v1527 = vunpack.c.h.b16 %v513
        %v1528 = vunpack.c.l.b16 %v514
        %v1529 = vunpack.c.h.b16 %v514
        %v1530 = vunpack.c.l.b16 %v515
        %v1531 = vunpack.c.h.b16 %v515
        %v1532 = vunpack.c.l.b16 %v516
        %v1533 = vunpack.c.h.b16 %v516
        %v1534 = vunpack.c.l.b16 %v517
        %v1535 = vunpack.c.h.b16 %v517
        %v1536 = vunpack.c.l.b16 %v518
        %v1537 = vunpack.c.h.b16 %v518
        %v1538 = vunpack.c.l.b16 %v519
        %v1539 = vunpack.c.h.b16 %v519
        %v1540 = vunpack.c.l.b16 %v520
        %v1541 = vunpack.c.h.b16 %v520
        %v1542 = vunpack.c.l.b16 %v521
        %v1543 = vunpack.c.h.b16 %v521
        %v1544 = vunpack.c.l.b16 %v522
        %v1545 = vunpack.c.h.b16 %v522
        %v1546 = vunpack.c.l.b16 %v523
        %v1547 = vunpack.c.h.b16 %v523
        %v1548 = vunpack.c.l.b16 %v524
        %v1549 = vunpack.c.h.b16 %v524
        %v1550 = vunpack.c.l.b16 %v525
        %v1551 = vunpack.c.h.b16 %v525
        %v1552 = vunpack.c.l.b16 %v526
        %v1553 = vunpack.c.h.b16 %v526
        %v1554 = vunpack.c.l.b16 %v527
        %v1555 = vunpack.c.h.b16 %v527
        %v1556 = vunpack.c.l.b16 %v528
        %v1557 = vunpack.c.h.b16 %v528
        %v1558 = vunpack.c.l.b16 %v529
        %v1559 = vunpack.c.h.b16 %v529
        %v1560 = vunpack.c.l.b16 %v530
        %v1561 = vunpack.c.h.b16 %v530
        %v1562 = vunpack.c.l.b16 %v531
        %v1563 = vunpack.c.h.b16 %v531
        %v1564 = vunpack.c.l.b16 %v532
        %v1565 = vunpack.c.h.b16 %v532
        %v1566 = vunpack.c.l.b16 %v533
        %v1567 = vunpack.c.h.b16 %v533
        %v1568 = vunpack.c.l.b16 %v534
        %v1569 = vunpack.c.h.b16 %v534
        %v1570 = vunpack.c.l.b16 %v535
        %v1571 = vunpack.c.h.b16 %v535
        %v1572 = vunpack.c.l.b16 %v536
        %v1573 = vunpack.c.h.b16 %v536
        %v1574 = vunpack.c.l.b16 %v537
        %v1575 = vunpack.c.h.b16 %v537
        %v1576 = vunpack.c.l.b16 %v538
        %v1577 = vunpack.c.h.b16 %v538
        %v1578 = vunpack.c.l.b16 %v539
        %v1579 = vunpack.c.h.b16 %v539
        %v1580 = vunpack.c.l.b16 %v540
        %v1581 = vunpack.c.h.b16 %v540
        %v1582 = vunpack.c.l.b16 %v541
        %v1583 = vunpack.c.h.b16 %v541
        %v1584 = vunpack.c.l.b16 %v542
        %v1585 = vunpack.c.h.b16 %v542
        %v1586 = vunpack.c.l.b16 %v543
        %v1587 = vunpack.c.h.b16 %v543
        %v1588 = vunpack.c.l.b16 %v544
        %v1589 = vunpack.c.h.b16 %v544
        %v1590 = vunpack.c.l.b16 %v545
        %v1591 = vunpack.c.h.b16 %v545
        %v1592 = vunpack.c.l.b16 %v546
        %v1593 = vunpack.c.h.b16 %v546
        %v1594 = vunpack.c.l.b16 %v547
        %v1595 = vunpack.c.h.b16 %v547
        %v1596 = vunpack.c.l.b16 %v548
        %v1597 = vunpack.c.h.b16 %v548
        %v1598 = vunpack.c.l.b16 %v549
        %v1599 = vunpack.c.h.b16 %v549
        %v1600 = vunpack.c.l.b16 %v550
        %v1601 = vunpack.c.h.b16 %v550
        %v1602 = vunpack.c.l.b16 %v551
        %v1603 = vunpack.c.h.b16 %v551
        %v1604 = vunpack.c.l.b16 %v552
        %v1605 = vunpack.c.h.b16 %v552
        %v1606 = vunpack.c.l.b16 %v553
        %v1607 = vunpack.c.h.b16 %v553
        %v1608 = vunpack.c.l.b16 %v554
        %v1609 = vunpack.c.h.b16 %v554
        %v1610 = vunpack.c.l.b16 %v555
        %v1611 = vunpack.c.h.b16 %v555
        %v1612 = vunpack.c.l.b16 %v556
        %v1613 = vunpack.c.h.b16 %v556
        %v1614 = vunpack.c.l.b16 %v557
        %v1615 = vunpack.c.h.b16 %v557
        %v1616 = vunpack.c.l.b16 %v558
        %v1617 = vunpack.c.h.b16 %v558
        %v1618 = vunpack.c.l.b16 %v559
        %v1619 = vunpack.c.h.b16 %v559
        %v1620 = vunpack.c.l.b16 %v560
        %v1621 = vunpack.c.h.b16 %v560
        %v1622 = vunpack.c.l.b16 %v561
        %v1623 = vunpack.c.h.b16 %v561
        %v1624 = vunpack.c.l.b16 %v562
        %v1625 = vunpack.c.h.b16 %v562
        %v1626 = vunpack.c.l.b16 %v563
        %v1627 = vunpack.c.h.b16 %v563
        %v1628 = vunpack.c.l.b16 %v564
        %v1629 = vunpack.c.h.b16 %v564
        %v1630 = vunpack.c.l.b16 %v565
        %v1631 = vunpack.c.h.b16 %v565
        %v1632 = vunpack.c.l.b16 %v566
        %v1633 = vunpack.c.h.b16 %v566
        %v1634 = vunpack.c.l.b16 %v567
        %v1635 = vunpack.c.h.b16 %v567
        %v1636 = vunpack.c.l.b16 %v568
        %v1637 = vunpack.c.h.b16 %v568
        %v1638 = vunpack.c.l.b16 %v569
        %v1639 = vunpack.c.h.b16 %v569
        %v1640 = vunpack.c.l.b16 %v570
        %v1641 = vunpack.c.h.b16 %v570
        %v1642 = vunpack.c.l.b16 %v571
        %v1643 = vunpack.c.h.b16 %v571
        %v1644 = vunpack.c.l.b16 %v572
        %v1645 = vunpack.c.h.b16 %v572
        %v1646 = vunpack.c.l.b16 %v573
        %v1647 = vunpack.c.h.b16 %v573
        %v1648 = vunpack.c.l.b16 %v574
        %v1649 = vunpack.c.h.b16 %v574
        %v1650 = vunpack.c.l.b16 %v575
        %v1651 = vunpack.c.h.b16 %v575
        %v1652 = vunpack.c.l.b16 %v576
        %v1653 = vunpack.c.h.b16 %v576
        %v1654 = vunpack.c.l.b16 %v577
        %v1655 = vunpack.c.h.b16 %v577
        %v1656 = vunpack.c.l.b16 %v578
        %v1657 = vunpack.c.h.b16 %v578
        %v1658 = vunpack.c.l.b16 %v579
        %v1659 = vunpack.c.h.b16 %v579
        %v1660 = vunpack.c.l.b16 %v580
        %v1661 = vunpack.c.h.b16 %v580
        %v1662 = vunpack.c.l.b16 %v581
        %v1663 = vunpack.c.h.b16 %v581
        %v1664 = vunpack.c.l.b16 %v582
        %v1665 = vunpack.c.h.b16 %v582
        %v1666 = vunpack.c.l.b16 %v583
        %v1667 = vunpack.c.h.b16 %v583
        %v1668 = vunpack.c.l.b16 %v584
        %v1669 = vunpack.c.h.b16 %v584
        %v1670 = vunpack.c.l.b16 %v585
        %v1671 = vunpack.c.h.b16 %v585
        %v1672 = vunpack.c.l.b16 %v586
        %v1673 = vunpack.c.h.b16 %v586
        %v1674 = vunpack.c.l.b16 %v587
        %v1675 = vunpack.c.h.b16 %v587
        %v1676 = vunpack.c.l.b16 %v588
        %v1677 = vunpack.c.h.b16 %v588
        %v1678 = vunpack.c.l.b16 %v589
        %v1679 = vunpack.c.h.b16 %v589
        %v1680 = vunpack.c.l.b16 %v590
        %v1681 = vunpack.c.h.b16 %v590
        %v1682 = vunpack.c.l.b16 %v591
        %v1683 = vunpack.c.h.b16 %v591
        %v1684 = vunpack.c.l.b16 %v592
        %v1685 = vunpack.c.h.b16 %v592
        %v1686 = vunpack.c.l.b16 %v593
        %v1687 = vunpack.c.h.b16 %v593
        %v1688 = vunpack.c.l.b16 %v594
        %v1689 = vunpack.c.h.b16 %v594
        %v1690 = vunpack.c.l.b16 %v595
        %v1691 = vunpack.c.h.b16 %v595
        %v1692 = vunpack.c.l.b16 %v596
        %v1693 = vunpack.c.h.b16 %v596
        %v1694 = vunpack.c.l.b16 %v597
        %v1695 = vunpack.c.h.b16 %v597
        %v1696 = vunpack.c.l.b16 %v598
        %v1697 = vunpack.c.h.b16 %v598
        %v1698 = vunpack.c.l.b16 %v599
        %v1699 = vunpack.c.h.b16 %v599
        %v1700 = vunpack.c.l.b16 %v600
        %v1701 = vunpack.c.h.b16 %v600
        %v1702 = vunpack.c.l.b16 %v601
        %v1703 = vunpack.c.h.b16 %v601
        %v1704 = vunpack.c.l.b16 %v602
        %v1705 = vunpack.c.h.b16 %v602
        %v1706 = vunpack.c.l.b16 %v603
        %v1707 = vunpack.c.h.b16 %v603
        %v1708 = vunpack.c.l.b16 %v604
        %v1709 = vunpack.c.h.b16 %v604
        %v1710 = vunpack.c.l.b16 %v605
        %v1711 = vunpack.c.h.b16 %v605
        %v1712 = vunpack.c.l.b16 %v606
        %v1713 = vunpack.c.h.b16 %v606
        %v1714 = vunpack.c.l.b16 %v607
        %v1715 = vunpack.c.h.b16 %v607
        %v1716 = vunpack.c.l.b16 %v608
        %v1717 = vunpack.c.h.b16 %v608
        %v1718 = vunpack.c.l.b16 %v609
        %v1719 = vunpack.c.h.b16 %v609
        %v1720 = vunpack.c.l.b16 %v610
        %v1721 = vunpack.c.h.b16 %v610
        %v1722 = vunpack.c.l.b16 %v611
        %v1723 = vunpack.c.h.b16 %v611
        %v1724 = vunpack.c.l.b16 %v612
        %v1725 = vunpack.c.h.b16 %v612
        %v1726 = vunpack.c.l.b16 %v613
        %v1727 = vunpack.c.h.b16 %v613
        %v1728 = vunpack.c.l.b16 %v614
        %v1729 = vunpack.c.h.b16 %v614
        %v1730 = vunpack.c.l.b16 %v615
        %v1731 = vunpack.c.h.b16 %v615
        %v1732 = vunpack.c.l.b16 %v616
        %v1733 = vunpack.c.h.b16 %v616
        %v1734 = vunpack.c.l.b16 %v617
        %v1735 = vunpack.c.h.b16 %v617
        %v1736 = vunpack.c.l.b16 %v618
        %v1737 = vunpack.c.h.b16 %v618
        %v1738 = vunpack.c.l.b16 %v619
        %v1739 = vunpack.c.h.b16 %v619
        %v1740 = vunpack.c.l.b16 %v620
        %v1741 = vunpack.c.h.b16 %v620
        %v1742 = vunpack.c.l.b16 %v621
        %v1743 = vunpack.c.h.b16 %v621
        %v1744 = vunpack.c.l.b16 %v622
        %v1745 = vunpack.c.h.b16 %v622
        %v1746 = vunpack.c.l.b16 %v623
        %v1747 = vunpack.c.h.b16 %v623
        %v1748 = vunpack.c.l.b16 %v624
        %v1749 = vunpack.c.h.b16 %v624
        %v1750 = vunpack.c.l.b16 %v625
        %v1751 = vunpack.c.h.b16 %v625
        %v1752 = vunpack.c.l.b16 %v626
        %v1753 = vunpack.c.h.b16 %v626
        %v1754 = vunpack.c.l.b16 %v627
        %v1755 = vunpack.c.h.b16 %v627
        %v1756 = vunpack.c.l.b16 %v628
        %v1757 = vunpack.c.h.b16 %v628
        %v1758 = vunpack.c.l.b16 %v629
        %v1759 = vunpack.c.h.b16 %v629
        %v1760 = vunpack.c.l.b16 %v630
        %v1761 = vunpack.c.h.b16 %v630
        %v1762 = vunpack.c.l.b16 %v631
        %v1763 = vunpack.c.h.b16 %v631
        %v1764 = vunpack.c.l.b16 %v632
        %v1765 = vunpack.c.h.b16 %v632
        %v1766 = vunpack.c.l.b16 %v633
        %v1767 = vunpack.c.h.b16 %v633
        %v1768 = vunpack.c.l.b16 %v634
        %v1769 = vunpack.c.h.b16 %v634
        %v1770 = vunpack.c.l.b16 %v635
        %v1771 = vunpack.c.h.b16 %v635
        %v1772 = vunpack.c.l.b16 %v636
        %v1773 = vunpack.c.h.b16 %v636
        %v1774 = vunpack.c.l.b16 %v637
        %v1775 = vunpack.c.h.b16 %v637
        %v1776 = vunpack.c.l.b16 %v638
        %v1777 = vunpack.c.h.b16 %v638
        %v1778 = vunpack.c.l.b16 %v639
        %v1779 = vunpack.c.h.b16 %v639
        %v1780 = vunpack.c.l.b16 %v640
        %v1781 = vunpack.c.h.b16 %v640
        %v1782 = vunpack.c.l.b16 %v641
        %v1783 = vunpack.c.h.b16 %v641
        %v1784 = vunpack.c.l.b16 %v642
        %v1785 = vunpack.c.h.b16 %v642
        %v1786 = vunpack.c.l.b16 %v643
        %v1787 = vunpack.c.h.b16 %v643
        %v1788 = vunpack.c.l.b16 %v644
        %v1789 = vunpack.c.h.b16 %v644
        %v1790 = vunpack.c.l.b16 %v645
        %v1791 = vunpack.c.h.b16 %v645
        %v1792 = vunpack.c.l.b16 %v646
        %v1793 = vunpack.c.h.b16 %v646
        %v1794 = vunpack.c.l.b16 %v647
        %v1795 = vunpack.c.h.b16 %v647
        %v1796 = vunpack.c.l.b16 %v648
        %v1797 = vunpack.c.h.b16 %v648
        %v1798 = vunpack.c.l.b16 %v649
        %v1799 = vunpack.c.h.b16 %v649
        %v1800 = vunpack.c.l.b16 %v650
        %v1801 = vunpack.c.h.b16 %v650
        %v1802 = vunpack.c.l.b16 %v651
        %v1803 = vunpack.c.h.b16 %v651
        %v1804 = vunpack.c.l.b16 %v652
        %v1805 = vunpack.c.h.b16 %v652
        %v1806 = vunpack.c.l.b16 %v653
        %v1807 = vunpack.c.h.b16 %v653
        %v1808 = vunpack.c.l.b16 %v654
        %v1809 = vunpack.c.h.b16 %v654
        %v1810 = vunpack.c.l.b16 %v655
        %v1811 = vunpack.c.h.b16 %v655
        %v1812 = vunpack.c.l.b16 %v656
        %v1813 = vunpack.c.h.b16 %v656
        %v1814 = vunpack.c.l.b16 %v657
        %v1815 = vunpack.c.h.b16 %v657
        %v1816 = vunpack.c.l.b16 %v658
        %v1817 = vunpack.c.h.b16 %v658
        %v1818 = vunpack.c.l.b16 %v659
        %v1819 = vunpack.c.h.b16 %v659
        %v1820 = vunpack.c.l.b16 %v660
        %v1821 = vunpack.c.h.b16 %v660
        %v1822 = vunpack.c.l.b16 %v661
        %v1823 = vunpack.c.h.b16 %v661
        %v1824 = vunpack.c.l.b16 %v662
        %v1825 = vunpack.c.h.b16 %v662
        %v1826 = vunpack.c.l.b16 %v663
        %v1827 = vunpack.c.h.b16 %v663
        %v1828 = vunpack.c.l.b16 %v664
        %v1829 = vunpack.c.h.b16 %v664
        %v1830 = vunpack.c.l.b16 %v665
        %v1831 = vunpack.c.h.b16 %v665
        %v1832 = vunpack.c.l.b16 %v666
        %v1833 = vunpack.c.h.b16 %v666
        %v1834 = vunpack.c.l.b16 %v667
        %v1835 = vunpack.c.h.b16 %v667
        %v1836 = vunpack.c.l.b16 %v668
        %v1837 = vunpack.c.h.b16 %v668
        %v1838 = vunpack.c.l.b16 %v669
        %v1839 = vunpack.c.h.b16 %v669
        %v1840 = vunpack.c.l.b16 %v670
        %v1841 = vunpack.c.h.b16 %v670
        %v1842 = vunpack.c.l.b16 %v671
        %v1843 = vunpack.c.h.b16 %v671
        %v1844 = vunpack.c.l.b16 %v672
        %v1845 = vunpack.c.h.b16 %v672
        %v1846 = vunpack.c.l.b16 %v673
        %v1847 = vunpack.c.h.b16 %v673
        %v1848 = vunpack.c.l.b16 %v674
        %v1849 = vunpack.c.h.b16 %v674
        %v1850 = vunpack.c.l.b16 %v675
        %v1851 = vunpack.c.h.b16 %v675
        %v1852 = vunpack.c.l.b16 %v676
        %v1853 = vunpack.c.h.b16 %v676
        %v1854 = vunpack.c.l.b16 %v677
        %v1855 = vunpack.c.h.b16 %v677
        %v1856 = vunpack.c.l.b16 %v678
        %v1857 = vunpack.c.h.b16 %v678
        %v1858 = vunpack.c.l.b16 %v679
        %v1859 = vunpack.c.h.b16 %v679
        %v1860 = vunpack.c.l.b16 %v680
        %v1861 = vunpack.c.h.b16 %v680
        %v1862 = vunpack.c.l.b16 %v681
        %v1863 = vunpack.c.h.b16 %v681
        %v1864 = vunpack.c.l.b16 %v682
        %v1865 = vunpack.c.h.b16 %v682
        %v1866 = vunpack.c.l.b16 %v683
        %v1867 = vunpack.c.h.b16 %v683
        %v1868 = vunpack.c.l.b16 %v684
        %v1869 = vunpack.c.h.b16 %v684
        %v1870 = vunpack.c.l.b16 %v685
        %v1871 = vunpack.c.h.b16 %v685
        %v1872 = vunpack.c.l.b16 %v686
        %v1873 = vunpack.c.h.b16 %v686
        %v1874 = vunpack.c.l.b16 %v687
        %v1875 = vunpack.c.h.b16 %v687
        %v1876 = vunpack.c.l.b16 %v688
        %v1877 = vunpack.c.h.b16 %v688
        %v1878 = vunpack.c.l.b16 %v689
        %v1879 = vunpack.c.h.b16 %v689
        %v1880 = vunpack.c.l.b16 %v690
        %v1881 = vunpack.c.h.b16 %v690
        %v1882 = vunpack.c.l.b16 %v691
        %v1883 = vunpack.c.h.b16 %v691
        %v1884 = vunpack.c.l.b16 %v692
        %v1885 = vunpack.c.h.b16 %v692
        %v1886 = vunpack.c.l.b16 %v693
        %v1887 = vunpack.c.h.b16 %v693
        %v1888 = vunpack.c.l.b16 %v694
        %v1889 = vunpack.c.h.b16 %v694
        %v1890 = vunpack.c.l.b16 %v695
        %v1891 = vunpack.c.h.b16 %v695
        %v1892 = vunpack.c.l.b16 %v696
        %v1893 = vunpack.c.h.b16 %v696
        %v1894 = vunpack.c.l.b16 %v697
        %v1895 = vunpack.c.h.b16 %v697
        %v1896 = vunpack.c.l.b16 %v698
        %v1897 = vunpack.c.h.b16 %v698
        %v1898 = vunpack.c.l.b16 %v699
        %v1899 = vunpack.c.h.b16 %v699
        %v1900 = vunpack.c.l.b16 %v700
        %v1901 = vunpack.c.h.b16 %v700
        %v1902 = vunpack.c.l.b16 %v701
        %v1903 = vunpack.c.h.b16 %v701
        %v1904 = vunpack.c.l.b16 %v702
        %v1905 = vunpack.c.h.b16 %v702
        %v1906 = vunpack.c.l.b16 %v703
        %v1907 = vunpack.c.h.b16 %v703
        %v1908 = vunpack.c.l.b16 %v704
        %v1909 = vunpack.c.h.b16 %v704
        %v1910 = vunpack.c.l.b16 %v705
        %v1911 = vunpack.c.h.b16 %v705
        %v1912 = vunpack.c.l.b16 %v706
        %v1913 = vunpack.c.h.b16 %v706
        %v1914 = vunpack.c.l.b16 %v707
        %v1915 = vunpack.c.h.b16 %v707
        %v1916 = vunpack.c.l.b16 %v708
        %v1917 = vunpack.c.h.b16 %v708
        %v1918 = vunpack.c.l.b16 %v709
        %v1919 = vunpack.c.h.b16 %v709
        %v1920 = vunpack.c.l.b16 %v710
        %v1921 = vunpack.c.h.b16 %v710
        %v1922 = vunpack.c.l.b16 %v711
        %v1923 = vunpack.c.h.b16 %v711
        %v1924 = vunpack.c.l.b16 %v712
        %v1925 = vunpack.c.h.b16 %v712
        %v1926 = vunpack.c.l.b16 %v713
        %v1927 = vunpack.c.h.b16 %v713
        %v1928 = vunpack.c.l.b16 %v714
        %v1929 = vunpack.c.h.b16 %v714
        %v1930 = vunpack.c.l.b16 %v715
        %v1931 = vunpack.c.h.b16 %v715
        %v1932 = vunpack.c.l.b16 %v716
        %v1933 = vunpack.c.h.b16 %v716
        %v1934 = vunpack.c.l.b16 %v717
        %v1935 = vunpack.c.h.b16 %v717
        %v1936 = vunpack.c.l.b16 %v718
        %v1937 = vunpack.c.h.b16 %v718
        %v1938 = vunpack.c.l.b16 %v719
        %v1939 = vunpack.c.h.b16 %v719
        %v1940 = vunpack.c.l.b16 %v720
        %v1941 = vunpack.c.h.b16 %v720
        %v1942 = vunpack.c.l.b16 %v721
        %v1943 = vunpack.c.h.b16 %v721
        %v1944 = vunpack.c.l.b16 %v722
        %v1945 = vunpack.c.h.b16 %v722
        %v1946 = vunpack.c.l.b16 %v723
        %v1947 = vunpack.c.h.b16 %v723
        %v1948 = vunpack.c.l.b16 %v724
        %v1949 = vunpack.c.h.b16 %v724
        %v1950 = vunpack.c.l.b16 %v725
        %v1951 = vunpack.c.h.b16 %v725
        %v1952 = vunpack.c.l.b16 %v726
        %v1953 = vunpack.c.h.b16 %v726
        %v1954 = vunpack.c.l.b16 %v727
        %v1955 = vunpack.c.h.b16 %v727
        %v1956 = vunpack.c.l.b16 %v728
        %v1957 = vunpack.c.h.b16 %v728
        %v1958 = vunpack.c.l.b16 %v729
        %v1959 = vunpack.c.h.b16 %v729
        %v1960 = vunpack.c.l.b16 %v730
        %v1961 = vunpack.c.h.b16 %v730
        %v1962 = vunpack.c.l.b16 %v731
        %v1963 = vunpack.c.h.b16 %v731
        %v1964 = vunpack.c.l.b16 %v732
        %v1965 = vunpack.c.h.b16 %v732
        %v1966 = vunpack.c.l.b16 %v733
        %v1967 = vunpack.c.h.b16 %v733
        %v1968 = vunpack.c.l.b16 %v734
        %v1969 = vunpack.c.h.b16 %v734
        %v1970 = vunpack.c.l.b16 %v735
        %v1971 = vunpack.c.h.b16 %v735
        %v1972 = vpack.c.b16 %v1206, %v1204
        %v1973 = vpack.c.b16 %v1207, %v1205
        %v1974 = vpack.c.b16 %v1210, %v1208
        %v1975 = vpack.c.b16 %v1211, %v1209
        %v1976 = vpack.c.b16 %v1214, %v1212
        %v1977 = vpack.c.b16 %v1215, %v1213
        %v1978 = vpack.c.b16 %v1218, %v1216
        %v1979 = vpack.c.b16 %v1219, %v1217
        %v1980 = vpack.c.b16 %v1222, %v1220
        %v1981 = vpack.c.b16 %v1223, %v1221
        %v1982 = vpack.c.b16 %v1226, %v1224
        %v1983 = vpack.c.b16 %v1227, %v1225
        %v1984 = vpack.c.b16 %v1230, %v1228
        %v1985 = vpack.c.b16 %v1231, %v1229
        %v1986 = vpack.c.b16 %v1234, %v1232
        %v1987 = vpack.c.b16 %v1235, %v1233
        %v1988 = vpack.c.b16 %v1238, %v1236
        %v1989 = vpack.c.b16 %v1239, %v1237
        %v1990 = vpack.c.b16 %v1242, %v1240
        %v1991 = vpack.c.b16 %v1243, %v1241
        %v1992 = vpack.c.b16 %v1246, %v1244
        %v1993 = vpack.c.b16 %v1247, %v1245
        %v1994 = vpack.c.b16 %v1250, %v1248
        %v1995 = vpack.c.b16 %v1251, %v1249
        %v1996 = vpack.c.b16 %v1254, %v1252
        %v1997 = vpack.c.b16 %v1255, %v1253
        %v1998 = vpack.c.b16 %v1258, %v1256
        %v1999 = vpack.c.b16 %v1259, %v1257
        %v2000 = vpack.c.b16 %v1262, %v1260
        %v2001 = vpack.c.b16 %v1263, %v1261
        %v2002 = vpack.c.b16 %v1266, %v1264
        %v2003 = vpack.c.b16 %v1267, %v1265
        %v2004 = vpack.c.b16 %v1270, %v1268
        %v2005 = vpack.c.b16 %v1271, %v1269
        %v2006 = vpack.c.b16 %v1274, %v1272
        %v2007 = vpack.c.b16 %v1275, %v1273
        %v2008 = vpack.c.b16 %v1278, %v1276
        %v2009 = vpack.c.b16 %v1279, %v1277
        %v2010 = vpack.c.b16 %v1282, %v1280
        %v2011 = vpack.c.b16 %v1283, %v1281
        %v2012 = vpack.c.b16 %v1286, %v1284
        %v2013 = vpack.c.b16 %v1287, %v1285
        %v2014 = vpack.c.b16 %v1290, %v1288
        %v2015 = vpack.c.b16 %v1291, %v1289
        %v2016 = vpack.c.b16 %v1294, %v1292
        %v2017 = vpack.c.b16 %v1295, %v1293
        %v2018 = vpack.c.b16 %v1298, %v1296
        %v2019 = vpack.c.b16 %v1299, %v1297
        %v2020 = vpack.c.b16 %v1302, %v1300
        %v2021 = vpack.c.b16 %v1303, %v1301
        %v2022 = vpack.c.b16 %v1306, %v1304
        %v2023 = vpack.c.b16 %v1307, %v1305
        %v2024 = vpack.c.b16 %v1310, %v1308
        %v2025 = vpack.c.b16 %v1311, %v1309
        %v2026 = vpack.c.b16 %v1314, %v1312
        %v2027 = vpack.c.b16 %v1315, %v1313
        %v2028 = vpack.c.b16 %v1318, %v1316
        %v2029 = vpack.c.b16 %v1319, %v1317
        %v2030 = vpack.c.b16 %v1322, %v1320
        %v2031 = vpack.c.b16 %v1323, %v1321
        %v2032 = vpack.c.b16 %v1326, %v1324
        %v2033 = vpack.c.b16 %v1327, %v1325
        %v2034 = vpack.c.b16 %v1330, %v1328
        %v2035 = vpack.c.b16 %v1331, %v1329
        %v2036 = vpack.c.b16 %v1334, %v1332
        %v2037 = vpack.c.b16 %v1335, %v1333
        %v2038 = vpack.c.b16 %v1338, %v1336
        %v2039 = vpack.c.b16 %v1339, %v1337
        %v2040 = vpack.c.b16 %v1342, %v1340
        %v2041 = vpack.c.b16 %v1343, %v1341
        %v2042 = vpack.c.b16 %v1346, %v1344
        %v2043 = vpack.c.b16 %v1347, %v1345
        %v2044 = vpack.c.b16 %v1350, %v1348
        %v2045 = vpack.c.b16 %v1351, %v1349
        %v2046 = vpack.c.b16 %v1354, %v1352
        %v2047 = vpack.c.b16 %v1355, %v1353
        %v2048 = vpack.c.b16 %v1358, %v1356
        %v2049 = vpack.c.b16 %v1359, %v1357
        %v2050 = vpack.c.b16 %v1362, %v1360
        %v2051 = vpack.c.b16 %v1363, %v1361
        %v2052 = vpack.c.b16 %v1366, %v1364
        %v2053 = vpack.c.b16 %v1367, %v1365
        %v2054 = vpack.c.b16 %v1370, %v1368
        %v2055 = vpack.c.b16 %v1371, %v1369
        %v2056 = vpack.c.b16 %v1374, %v1372
        %v2057 = vpack.c.b16 %v1375, %v1373
        %v2058 = vpack.c.b16 %v1378, %v1376
        %v2059 = vpack.c.b16 %v1379, %v1377
        %v2060 = vpack.c.b16 %v1382, %v1380
        %v2061 = vpack.c.b16 %v1383, %v1381
        %v2062 = vpack.c.b16 %v1386, %v1384
        %v2063 = vpack.c.b16 %v1387, %v1385
        %v2064 = vpack.c.b16 %v1390, %v1388
        %v2065 = vpack.c.b16 %v1391, %v1389
        %v2066 = vpack.c.b16 %v1394, %v1392
        %v2067 = vpack.c.b16 %v1395, %v1393
        %v2068 = vpack.c.b16 %v1398, %v1396
        %v2069 = vpack.c.b16 %v1399, %v1397
        %v2070 = vpack.c.b16 %v1402, %v1400
        %v2071 = vpack.c.b16 %v1403, %v1401
        %v2072 = vpack.c.b16 %v1406, %v1404
        %v2073 = vpack.c.b16 %v1407, %v1405
        %v2074 = vpack.c.b16 %v1410, %v1408
        %v2075 = vpack.c.b16 %v1411, %v1409
        %v2076 = vpack.c.b16 %v1414, %v1412
        %v2077 = vpack.c.b16 %v1415, %v1413
        %v2078 = vpack.c.b16 %v1418, %v1416
        %v2079 = vpack.c.b16 %v1419, %v1417
        %v2080 = vpack.c.b16 %v1422, %v1420
        %v2081 = vpack.c.b16 %v1423, %v1421
        %v2082 = vpack.c.b16 %v1426, %v1424
        %v2083 = vpack.c.b16 %v1427, %v1425
        %v2084 = vpack.c.b16 %v1430, %v1428
        %v2085 = vpack.c.b16 %v1431, %v1429
        %v2086 = vpack.c.b16 %v1434, %v1432
        %v2087 = vpack.c.b16 %v1435, %v1433
        %v2088 = vpack.c.b16 %v1438, %v1436
        %v2089 = vpack.c.b16 %v1439, %v1437
        %v2090 = vpack.c.b16 %v1442, %v1440
        %v2091 = vpack.c.b16 %v1443, %v1441
        %v2092 = vpack.c.b16 %v1446, %v1444
        %v2093 = vpack.c.b16 %v1447, %v1445
        %v2094 = vpack.c.b16 %v1450, %v1448
        %v2095 = vpack.c.b16 %v1451, %v1449
        %v2096 = vpack.c.b16 %v1454, %v1452
        %v2097 = vpack.c.b16 %v1455, %v1453
        %v2098 = vpack.c.b16 %v1458, %v1456
        %v2099 = vpack.c.b16 %v1459, %v1457
        %v2100 = vpack.c.b16 %v1462, %v1460
        %v2101 = vpack.c.b16 %v1463, %v1461
        %v2102 = vpack.c.b16 %v1466, %v1464
        %v2103 = vpack.c.b16 %v1467, %v1465
        %v2104 = vpack.c.b16 %v1470, %v1468
        %v2105 = vpack.c.b16 %v1471, %v1469
        %v2106 = vpack.c.b16 %v1474, %v1472
        %v2107 = vpack.c.b16 %v1475, %v1473
        %v2108 = vpack.c.b16 %v1478, %v1476
        %v2109 = vpack.c.b16 %v1479, %v1477
        %v2110 = vpack.c.b16 %v1482, %v1480
        %v2111 = vpack.c.b16 %v1483, %v1481
        %v2112 = vpack.c.b16 %v1486, %v1484
        %v2113 = vpack.c.b16 %v1487, %v1485
        %v2114 = vpack.c.b16 %v1490, %v1488
        %v2115 = vpack.c.b16 %v1491, %v1489
        %v2116 = vpack.c.b16 %v1494, %v1492
        %v2117 = vpack.c.b16 %v1495, %v1493
        %v2118 = vpack.c.b16 %v1498, %v1496
        %v2119 = vpack.c.b16 %v1499, %v1497
        %v2120 = vpack.c.b16 %v1502, %v1500
        %v2121 = vpack.c.b16 %v1503, %v1501
        %v2122 = vpack.c.b16 %v1506, %v1504
        %v2123 = vpack.c.b16 %v1507, %v1505
        %v2124 = vpack.c.b16 %v1510, %v1508
        %v2125 = vpack.c.b16 %v1511, %v1509
        %v2126 = vpack.c.b16 %v1514, %v1512
        %v2127 = vpack.c.b16 %v1515, %v1513
        %v2128 = vpack.c.b16 %v1518, %v1516
        %v2129 = vpack.c.b16 %v1519, %v1517
        %v2130 = vpack.c.b16 %v1522, %v1520
        %v2131 = vpack.c.b16 %v1523, %v1521
        %v2132 = vpack.c.b16 %v1526, %v1524
        %v2133 = vpack.c.b16 %v1527, %v1525
        %v2134 = vpack.c.b16 %v1530, %v1528
        %v2135 = vpack.c.b16 %v1531, %v1529
        %v2136 = vpack.c.b16 %v1534, %v1532
        %v2137 = vpack.c.b16 %v1535, %v1533
        %v2138 = vpack.c.b16 %v1538, %v1536
        %v2139 = vpack.c.b16 %v1539, %v1537
        %v2140 = vpack.c.b16 %v1542, %v1540
        %v2141 = vpack.c.b16 %v1543, %v1541
        %v2142 = vpack.c.b16 %v1546, %v1544
        %v2143 = vpack.c.b16 %v1547, %v1545
        %v2144 = vpack.c.b16 %v1550, %v1548
        %v2145 = vpack.c.b16 %v1551, %v1549
        %v2146 = vpack.c.b16 %v1554, %v1552
        %v2147 = vpack.c.b16 %v1555, %v1553
        %v2148 = vpack.c.b16 %v1558, %v1556
        %v2149 = vpack.c.b16 %v1559, %v1557
        %v2150 = vpack.c.b16 %v1562, %v1560
        %v2151 = vpack.c.b16 %v1563, %v1561
        %v2152 = vpack.c.b16 %v1566, %v1564
        %v2153 = vpack.c.b16 %v1567, %v1565
        %v2154 = vpack.c.b16 %v1570, %v1568
        %v2155 = vpack.c.b16 %v1571, %v1569
        %v2156 = vpack.c.b16 %v1574, %v1572
        %v2157 = vpack.c.b16 %v1575, %v1573
        %v2158 = vpack.c.b16 %v1578, %v1576
        %v2159 = vpack.c.b16 %v1579, %v1577
        %v2160 = vpack.c.b16 %v1582, %v1580
        %v2161 = vpack.c.b16 %v1583, %v1581
        %v2162 = vpack.c.b16 %v1586, %v1584
        %v2163 = vpack.c.b16 %v1587, %v1585
        %v2164 = vpack.c.b16 %v1590, %v1588
        %v2165 = vpack.c.b16 %v1591, %v1589
        %v2166 = vpack.c.b16 %v1594, %v1592
        %v2167 = vpack.c.b16 %v1595, %v1593
        %v2168 = vpack.c.b16 %v1598, %v1596
        %v2169 = vpack.c.b16 %v1599, %v1597
        %v2170 = vpack.c.b16 %v1602, %v1600
        %v2171 = vpack.c.b16 %v1603, %v1601
        %v2172 = vpack.c.b16 %v1606, %v1604
        %v2173 = vpack.c.b16 %v1607, %v1605
        %v2174 = vpack.c.b16 %v1610, %v1608
        %v2175 = vpack.c.b16 %v1611, %v1609
        %v2176 = vpack.c.b16 %v1614, %v1612
        %v2177 = vpack.c.b16 %v1615, %v1613
        %v2178 = vpack.c.b16 %v1618, %v1616
        %v2179 = vpack.c.b16 %v1619, %v1617
        %v2180 = vpack.c.b16 %v1622, %v1620
        %v2181 = vpack.c.b16 %v1623, %v1621
        %v2182 = vpack.c.b16 %v1626, %v1624
        %v2183 = vpack.c.b16 %v1627, %v1625
        %v2184 = vpack.c.b16 %v1630, %v1628
        %v2185 = vpack.c.b16 %v1631, %v1629
        %v2186 = vpack.c.b16 %v1634, %v1632
        %v2187 = vpack.c.b16 %v1635, %v1633
        %v2188 = vpack.c.b16 %v1638, %v1636
        %v2189 = vpack.c.b16 %v1639, %v1637
        %v2190 = vpack.c.b16 %v1642, %v1640
        %v2191 = vpack.c.b16 %v1643, %v1641
        %v2192 = vpack.c.b16 %v1646, %v1644
        %v2193 = vpack.c.b16 %v1647, %v1645
        %v2194 = vpack.c.b16 %v1650, %v1648
        %v2195 = vpack.c.b16 %v1651, %v1649
        %v2196 = vpack.c.b16 %v1654, %v1652
        %v2197 = vpack.c.b16 %v1655, %v1653
        %v2198 = vpack.c.b16 %v1658, %v1656
        %v2199 = vpack.c.b16 %v1659, %v1657
        %v2200 = vpack.c.b16 %v1662, %v1660
        %v2201 = vpack.c.b16 %v1663, %v1661
        %v2202 = vpack.c.b16 %v1666, %v1664
        %v2203 = vpack.c.b16 %v1667, %v1665
        %v2204 = vpack.c.b16 %v1670, %v1668
        %v2205 = vpack.c.b16 %v1671, %v1669
        %v2206 = vpack.c.b16 %v1674, %v1672
        %v2207 = vpack.c.b16 %v1675, %v1673
        %v2208 = vpack.c.b16 %v1678, %v1676
        %v2209 = vpack.c.b16 %v1679, %v1677
        %v2210 = vpack.c.b16 %v1682, %v1680
        %v2211 = vpack.c.b16 %v1683, %v1681
        %v2212 = vpack.c.b16 %v1686, %v1684
        %v2213 = vpack.c.b16 %v1687, %v1685
        %v2214 = vpack.c.b16 %v1690, %v1688
        %v2215 = vpack.c.b16 %v1691, %v1689
        %v2216 = vpack.c.b16 %v1694, %v1692
        %v2217 = vpack.c.b16 %v1695, %v1693
        %v2218 = vpack.c.b16 %v1698, %v1696
        %v2219 = vpack.c.b16 %v1699, %v1697
        %v2220 = vpack.c.b16 %v1702, %v1700
        %v2221 = vpack.c.b16 %v1703, %v1701
        %v2222 = vpack.c.b16 %v1706, %v1704
        %v2223 = vpack.c.b16 %v1707, %v1705
        %v2224 = vpack.c.b16 %v1710, %v1708
        %v2225 = vpack.c.b16 %v1711, %v1709
        %v2226 = vpack.c.b16 %v1714, %v1712
        %v2227 = vpack.c.b16 %v1715, %v1713
        %v2228 = vpack.c.b16 %v1718, %v1716
        %v2229 = vpack.c.b16 %v1719, %v1717
        %v2230 = vpack.c.b16 %v1722, %v1720
        %v2231 = vpack.c.b16 %v1723, %v1721
        %v2232 = vpack.c.b16 %v1726, %v1724
        %v2233 = vpack.c.b16 %v1727, %v1725
        %v2234 = vpack.c.b16 %v1730, %v1728
        %v2235 = vpack.c.b16 %v1731, %v1729
        %v2236 = vpack.c.b16 %v1734, %v1732
        %v2237 = vpack.c.b16 %v1735, %v1733
        %v2238 = vpack.c.b16 %v1738, %v1736
        %v2239 = vpack.c.b16 %v1739, %v1737
        %v2240 = vpack.c.b16 %v1742, %v1740
        %v2241 = vpack.c.b16 %v1743, %v1741
        %v2242 = vpack.c.b16 %v1746, %v1744
        %v2243 = vpack.c.b16 %v1747, %v1745
        %v2244 = vpack.c.b16 %v1750, %v1748
        %v2245 = vpack.c.b16 %v1751, %v1749
        %v2246 = vpack.c.b16 %v1754, %v1752
        %v2247 = vpack.c.b16 %v1755, %v1753
        %v2248 = vpack.c.b16 %v1758, %v1756
        %v2249 = vpack.c.b16 %v1759, %v1757
        %v2250 = vpack.c.b16 %v1762, %v1760
        %v2251 = vpack.c.b16 %v1763, %v1761
        %v2252 = vpack.c.b16 %v1766, %v1764
        %v2253 = vpack.c.b16 %v1767, %v1765
        %v2254 = vpack.c.b16 %v1770, %v1768
        %v2255 = vpack.c.b16 %v1771, %v1769
        %v2256 = vpack.c.b16 %v1774, %v1772
        %v2257 = vpack.c.b16 %v1775, %v1773
        %v2258 = vpack.c.b16 %v1778, %v1776
        %v2259 = vpack.c.b16 %v1779, %v1777
        %v2260 = vpack.c.b16 %v1782, %v1780
        %v2261 = vpack.c.b16 %v1783, %v1781
        %v2262 = vpack.c.b16 %v1786, %v1784
        %v2263 = vpack.c.b16 %v1787, %v1785
        %v2264 = vpack.c.b16 %v1790, %v1788
        %v2265 = vpack.c.b16 %v1791, %v1789
        %v2266 = vpack.c.b16 %v1794, %v1792
        %v2267 = vpack.c.b16 %v1795, %v1793
        %v2268 = vpack.c.b16 %v1798, %v1796
        %v2269 = vpack.c.b16 %v1799, %v1797
        %v2270 = vpack.c.b16 %v1802, %v1800
        %v2271 = vpack.c.b16 %v1803, %v1801
        %v2272 = vpack.c.b16 %v1806, %v1804
        %v2273 = vpack.c.b16 %v1807, %v1805
        %v2274 = vpack.c.b16 %v1810, %v1808
        %v2275 = vpack.c.b16 %v1811, %v1809
        %v2276 = vpack.c.b16 %v1814, %v1812
        %v2277 = vpack.c.b16 %v1815, %v1813
        %v2278 = vpack.c.b16 %v1818, %v1816
        %v2279 = vpack.c.b16 %v1819, %v1817
        %v2280 = vpack.c.b16 %v1822, %v1820
        %v2281 = vpack.c.b16 %v1823, %v1821
        %v2282 = vpack.c.b16 %v1826, %v1824
        %v2283 = vpack.c.b16 %v1827, %v1825
        %v2284 = vpack.c.b16 %v1830, %v1828
        %v2285 = vpack.c.b16 %v1831, %v1829
        %v2286 = vpack.c.b16 %v1834, %v1832
        %v2287 = vpack.c.b16 %v1835, %v1833
        %v2288 = vpack.c.b16 %v1838, %v1836
        %v2289 = vpack.c.b16 %v1839, %v1837
        %v2290 = vpack.c.b16 %v1842, %v1840
        %v2291 = vpack.c.b16 %v1843, %v1841
        %v2292 = vpack.c.b16 %v1846, %v1844
        %v2293 = vpack.c.b16 %v1847, %v1845
        %v2294 = vpack.c.b16 %v1850, %v1848
        %v2295 = vpack.c.b16 %v1851, %v1849
        %v2296 = vpack.c.b16 %v1854, %v1852
        %v2297 = vpack.c.b16 %v1855, %v1853
        %v2298 = vpack.c.b16 %v1858, %v1856
        %v2299 = vpack.c.b16 %v1859, %v1857
        %v2300 = vpack.c.b16 %v1862, %v1860
        %v2301 = vpack.c.b16 %v1863, %v1861
        %v2302 = vpack.c.b16 %v1866, %v1864
        %v2303 = vpack.c.b16 %v1867, %v1865
        %v2304 = vpack.c.b16 %v1870, %v1868
        %v2305 = vpack.c.b16 %v1871, %v1869
        %v2306 = vpack.c.b16 %v1874, %v1872
        %v2307 = vpack.c.b16 %v1875, %v1873
        %v2308 = vpack.c.b16 %v1878, %v1876
        %v2309 = vpack.c.b16 %v1879, %v1877
        %v2310 = vpack.c.b16 %v1882, %v1880
        %v2311 = vpack.c.b16 %v1883, %v1881
        %v2312 = vpack.c.b16 %v1886, %v1884
        %v2313 = vpack.c.b16 %v1887, %v1885
        %v2314 = vpack.c.b16 %v1890, %v1888
        %v2315 = vpack.c.b16 %v1891, %v1889
        %v2316 = vpack.c.b16 %v1894, %v1892
        %v2317 = vpack.c.b16 %v1895, %v1893
        %v2318 = vpack.c.b16 %v1898, %v1896
        %v2319 = vpack.c.b16 %v1899, %v1897
        %v2320 = vpack.c.b16 %v1902, %v1900
        %v2321 = vpack.c.b16 %v1903, %v1901
        %v2322 = vpack.c.b16 %v1906, %v1904
        %v2323 = vpack.c.b16 %v1907, %v1905
        %v2324 = vpack.c.b16 %v1910, %v1908
        %v2325 = vpack.c.b16 %v1911, %v1909
        %v2326 = vpack.c.b16 %v1914, %v1912
        %v2327 = vpack.c.b16 %v1915, %v1913
        %v2328 = vpack.c.b16 %v1918, %v1916
        %v2329 = vpack.c.b16 %v1919, %v1917
        %v2330 = vpack.c.b16 %v1922, %v1920
        %v2331 = vpack.c.b16 %v1923, %v1921
        %v2332 = vpack.c.b16 %v1926, %v1924
        %v2333 = vpack.c.b16 %v1927, %v1925
        %v2334 = vpack.c.b16 %v1930, %v1928
        %v2335 = vpack.c.b16 %v1931, %v1929
        %v2336 = vpack.c.b16 %v1934, %v1932
        %v2337 = vpack.c.b16 %v1935, %v1933
        %v2338 = vpack.c.b16 %v1938, %v1936
        %v2339 = vpack.c.b16 %v1939, %v1937
        %v2340 = vpack.c.b16 %v1942, %v1940
        %v2341 = vpack.c.b16 %v1943, %v1941
        %v2342 = vpack.c.b16 %v1946, %v1944
        %v2343 = vpack.c.b16 %v1947, %v1945
        %v2344 = vpack.c.b16 %v1950, %v1948
        %v2345 = vpack.c.b16 %v1951, %v1949
        %v2346 = vpack.c.b16 %v1954, %v1952
        %v2347 = vpack.c.b16 %v1955, %v1953
        %v2348 = vpack.c.b16 %v1958, %v1956
        %v2349 = vpack.c.b16 %v1959, %v1957
        %v2350 = vpack.c.b16 %v1962, %v1960
        %v2351 = vpack.c.b16 %v1963, %v1961
        %v2352 = vpack.c.b16 %v1966, %v1964
        %v2353 = vpack.c.b16 %v1967, %v1965
        %v2354 = vpack.c.b16 %v1970, %v1968
        %v2355 = vpack.c.b16 %v1971, %v1969
        %2740 = vmatprep.subr.bf16.mxu0 %v1987
        %2741 = vmatpush1.bf16.msra.mxu0 %v1986
        %2742 = vmatprep.subr.bf16.mxu0 %v1985
        %2743 = vmatpush1.bf16.msra.mxu0 %v1984
        %2744 = vmatprep.subr.bf16.mxu0 %v1983
        %2745 = vmatpush1.bf16.msra.mxu0 %v1982
        %2746 = vmatprep.subr.bf16.mxu0 %v1981
        %2747 = vmatpush1.bf16.msra.mxu0 %v1980
        %2748 = vmatprep.subr.bf16.mxu0 %v1979
        %2749 = vmatpush1.bf16.msra.mxu0 %v1978
        %2750 = vmatprep.subr.bf16.mxu0 %v1977
        %2751 = vmatpush1.bf16.msra.mxu0 %v1976
        %2752 = vmatprep.subr.bf16.mxu0 %v1975
        %2753 = vmatpush1.bf16.msra.mxu0 %v1974
        %2754 = vmatprep.subr.bf16.mxu0 %v1973
        %2755 = vmatpush1.bf16.msra.mxu0 %v1972
        %2756 = vmatprep.subr.bf16.mxu0 %v2003
        %2757 = vmatpush2.bf16.msra.mxu0 %v2002
        %2758 = vmatprep.subr.bf16.mxu0 %v2001
        %2759 = vmatpush2.bf16.msra.mxu0 %v2000
        %2760 = vmatprep.subr.bf16.mxu0 %v1999
        %2761 = vmatpush2.bf16.msra.mxu0 %v1998
        %2762 = vmatprep.subr.bf16.mxu0 %v1997
        %2763 = vmatpush2.bf16.msra.mxu0 %v1996
        %2764 = vmatprep.subr.bf16.mxu0 %v1995
        %2765 = vmatpush2.bf16.msra.mxu0 %v1994
        %2766 = vmatprep.subr.bf16.mxu0 %v1993
        %2767 = vmatpush2.bf16.msra.mxu0 %v1992
        %2768 = vmatprep.subr.bf16.mxu0 %v1991
        %2769 = vmatpush2.bf16.msra.mxu0 %v1990
        %2770 = vmatprep.subr.bf16.mxu0 %v1989
        %2771 = vmatpush2.bf16.msra.mxu0 %v1988
        %2772 = vmatprep.mubr.bf16.mxu0 %v773
        %2773 = vmatmul.mubr.bf16.gmra.mxu0 %v772
        %v2774 = vpop.f32.mrf.mxu0
        %v2775 = vadd.f32 0.0, %v2774
        %v2776 = vpop.f32.mrf.mxu0
        %v2777 = vadd.f32 0.0, %v2776
        %v2778 = vpop.f32.mrf.mxu0
        %v2779 = vpop.f32.mrf.mxu0
        %2780 = vdwg.mxu0
        %2781 = vmatprep.subr.bf16.mxu0 %v2019
        %2782 = vmatpush1.bf16.msra.mxu0 %v2018
        %2783 = vmatprep.subr.bf16.mxu0 %v2017
        %2784 = vmatpush1.bf16.msra.mxu0 %v2016
        %2785 = vmatprep.subr.bf16.mxu0 %v2015
        %2786 = vmatpush1.bf16.msra.mxu0 %v2014
        %2787 = vmatprep.subr.bf16.mxu0 %v2013
        %2788 = vmatpush1.bf16.msra.mxu0 %v2012
        %2789 = vmatprep.subr.bf16.mxu0 %v2011
        %2790 = vmatpush1.bf16.msra.mxu0 %v2010
        %2791 = vmatprep.subr.bf16.mxu0 %v2009
        %2792 = vmatpush1.bf16.msra.mxu0 %v2008
        %2793 = vmatprep.subr.bf16.mxu0 %v2007
        %2794 = vmatpush1.bf16.msra.mxu0 %v2006
        %2795 = vmatprep.subr.bf16.mxu0 %v2005
        %2796 = vmatpush1.bf16.msra.mxu0 %v2004
        %2797 = vmatprep.subr.bf16.mxu0 %v2035
        %2798 = vmatpush2.bf16.msra.mxu0 %v2034
        %2799 = vmatprep.subr.bf16.mxu0 %v2033
        %2800 = vmatpush2.bf16.msra.mxu0 %v2032
        %2801 = vmatprep.subr.bf16.mxu0 %v2031
        %2802 = vmatpush2.bf16.msra.mxu0 %v2030
        %2803 = vmatprep.subr.bf16.mxu0 %v2029
        %2804 = vmatpush2.bf16.msra.mxu0 %v2028
        %2805 = vmatprep.subr.bf16.mxu0 %v2027
        %2806 = vmatpush2.bf16.msra.mxu0 %v2026
        %2807 = vmatprep.subr.bf16.mxu0 %v2025
        %2808 = vmatpush2.bf16.msra.mxu0 %v2024
        %2809 = vmatprep.subr.bf16.mxu0 %v2023
        %2810 = vmatpush2.bf16.msra.mxu0 %v2022
        %2811 = vmatprep.subr.bf16.mxu0 %v2021
        %2812 = vmatpush2.bf16.msra.mxu0 %v2020
        %2813 = vmatprep.mubr.bf16.mxu0 %v775
        %2814 = vmatmul.mubr.bf16.gmra.mxu0 %v774
        %v2815 = vpop.f32.mrf.mxu0
        %v2816 = vadd.f32 %v2775, %v2815
        %v2817 = vpop.f32.mrf.mxu0
        %v2818 = vadd.f32 %v2777, %v2817
        %v2819 = vpop.f32.mrf.mxu0
        %v2820 = vpop.f32.mrf.mxu0
        %2821 = vdwg.mxu0
        %2822 = vmatprep.subr.bf16.mxu0 %v2051
        %2823 = vmatpush1.bf16.msra.mxu0 %v2050
        %2824 = vmatprep.subr.bf16.mxu0 %v2049
        %2825 = vmatpush1.bf16.msra.mxu0 %v2048
        %2826 = vmatprep.subr.bf16.mxu0 %v2047
        %2827 = vmatpush1.bf16.msra.mxu0 %v2046
        %2828 = vmatprep.subr.bf16.mxu0 %v2045
        %2829 = vmatpush1.bf16.msra.mxu0 %v2044
        %2830 = vmatprep.subr.bf16.mxu0 %v2043
        %2831 = vmatpush1.bf16.msra.mxu0 %v2042
        %2832 = vmatprep.subr.bf16.mxu0 %v2041
        %2833 = vmatpush1.bf16.msra.mxu0 %v2040
        %2834 = vmatprep.subr.bf16.mxu0 %v2039
        %2835 = vmatpush1.bf16.msra.mxu0 %v2038
        %2836 = vmatprep.subr.bf16.mxu0 %v2037
        %2837 = vmatpush1.bf16.msra.mxu0 %v2036
        %2838 = vmatprep.subr.bf16.mxu0 %v2067
        %2839 = vmatpush2.bf16.msra.mxu0 %v2066
        %2840 = vmatprep.subr.bf16.mxu0 %v2065
        %2841 = vmatpush2.bf16.msra.mxu0 %v2064
        %2842 = vmatprep.subr.bf16.mxu0 %v2063
        %2843 = vmatpush2.bf16.msra.mxu0 %v2062
        %2844 = vmatprep.subr.bf16.mxu0 %v2061
        %2845 = vmatpush2.bf16.msra.mxu0 %v2060
        %2846 = vmatprep.subr.bf16.mxu0 %v2059
        %2847 = vmatpush2.bf16.msra.mxu0 %v2058
        %2848 = vmatprep.subr.bf16.mxu0 %v2057
        %2849 = vmatpush2.bf16.msra.mxu0 %v2056
        %2850 = vmatprep.subr.bf16.mxu0 %v2055
        %2851 = vmatpush2.bf16.msra.mxu0 %v2054
        %2852 = vmatprep.subr.bf16.mxu0 %v2053
        %2853 = vmatpush2.bf16.msra.mxu0 %v2052
        %2854 = vmatprep.mubr.bf16.mxu0 %v777
        %2855 = vmatmul.mubr.bf16.gmra.mxu0 %v776
        %v2856 = vpop.f32.mrf.mxu0
        %v2857 = vadd.f32 %v2816, %v2856
        %v2858 = vpop.f32.mrf.mxu0
        %v2859 = vadd.f32 %v2818, %v2858
        %v2860 = vpop.f32.mrf.mxu0
        %v2861 = vpop.f32.mrf.mxu0
        %2862 = vdwg.mxu0
        %2863 = vmatprep.subr.bf16.mxu0 %v2083
        %2864 = vmatpush1.bf16.msra.mxu0 %v2082
        %2865 = vmatprep.subr.bf16.mxu0 %v2081
        %2866 = vmatpush1.bf16.msra.mxu0 %v2080
        %2867 = vmatprep.subr.bf16.mxu0 %v2079
        %2868 = vmatpush1.bf16.msra.mxu0 %v2078
        %2869 = vmatprep.subr.bf16.mxu0 %v2077
        %2870 = vmatpush1.bf16.msra.mxu0 %v2076
        %2871 = vmatprep.subr.bf16.mxu0 %v2075
        %2872 = vmatpush1.bf16.msra.mxu0 %v2074
        %2873 = vmatprep.subr.bf16.mxu0 %v2073
        %2874 = vmatpush1.bf16.msra.mxu0 %v2072
        %2875 = vmatprep.subr.bf16.mxu0 %v2071
        %2876 = vmatpush1.bf16.msra.mxu0 %v2070
        %2877 = vmatprep.subr.bf16.mxu0 %v2069
        %2878 = vmatpush1.bf16.msra.mxu0 %v2068
        %2879 = vmatprep.subr.bf16.mxu0 %v2099
        %2880 = vmatpush2.bf16.msra.mxu0 %v2098
        %2881 = vmatprep.subr.bf16.mxu0 %v2097
        %2882 = vmatpush2.bf16.msra.mxu0 %v2096
        %2883 = vmatprep.subr.bf16.mxu0 %v2095
        %2884 = vmatpush2.bf16.msra.mxu0 %v2094
        %2885 = vmatprep.subr.bf16.mxu0 %v2093
        %2886 = vmatpush2.bf16.msra.mxu0 %v2092
        %2887 = vmatprep.subr.bf16.mxu0 %v2091
        %2888 = vmatpush2.bf16.msra.mxu0 %v2090
        %2889 = vmatprep.subr.bf16.mxu0 %v2089
        %2890 = vmatpush2.bf16.msra.mxu0 %v2088
        %2891 = vmatprep.subr.bf16.mxu0 %v2087
        %2892 = vmatpush2.bf16.msra.mxu0 %v2086
        %2893 = vmatprep.subr.bf16.mxu0 %v2085
        %2894 = vmatpush2.bf16.msra.mxu0 %v2084
        %2895 = vmatprep.mubr.bf16.mxu0 %v779
        %2896 = vmatmul.mubr.bf16.gmra.mxu0 %v778
        %v2897 = vpop.f32.mrf.mxu0
        %v2898 = vadd.f32 %v2857, %v2897
        %v2899 = vpop.f32.mrf.mxu0
        %v2900 = vadd.f32 %v2859, %v2899
        %v2901 = vpop.f32.mrf.mxu0
        %v2902 = vpop.f32.mrf.mxu0
        %2903 = vdwg.mxu0
        %2904 = vmatprep.subr.bf16.mxu0 %v2115
        %2905 = vmatpush1.bf16.msra.mxu0 %v2114
        %2906 = vmatprep.subr.bf16.mxu0 %v2113
        %2907 = vmatpush1.bf16.msra.mxu0 %v2112
        %2908 = vmatprep.subr.bf16.mxu0 %v2111
        %2909 = vmatpush1.bf16.msra.mxu0 %v2110
        %2910 = vmatprep.subr.bf16.mxu0 %v2109
        %2911 = vmatpush1.bf16.msra.mxu0 %v2108
        %2912 = vmatprep.subr.bf16.mxu0 %v2107
        %2913 = vmatpush1.bf16.msra.mxu0 %v2106
        %2914 = vmatprep.subr.bf16.mxu0 %v2105
        %2915 = vmatpush1.bf16.msra.mxu0 %v2104
        %2916 = vmatprep.subr.bf16.mxu0 %v2103
        %2917 = vmatpush1.bf16.msra.mxu0 %v2102
        %2918 = vmatprep.subr.bf16.mxu0 %v2101
        %2919 = vmatpush1.bf16.msra.mxu0 %v2100
        %2920 = vmatprep.subr.bf16.mxu0 %v2131
        %2921 = vmatpush2.bf16.msra.mxu0 %v2130
        %2922 = vmatprep.subr.bf16.mxu0 %v2129
        %2923 = vmatpush2.bf16.msra.mxu0 %v2128
        %2924 = vmatprep.subr.bf16.mxu0 %v2127
        %2925 = vmatpush2.bf16.msra.mxu0 %v2126
        %2926 = vmatprep.subr.bf16.mxu0 %v2125
        %2927 = vmatpush2.bf16.msra.mxu0 %v2124
        %2928 = vmatprep.subr.bf16.mxu0 %v2123
        %2929 = vmatpush2.bf16.msra.mxu0 %v2122
        %2930 = vmatprep.subr.bf16.mxu0 %v2121
        %2931 = vmatpush2.bf16.msra.mxu0 %v2120
        %2932 = vmatprep.subr.bf16.mxu0 %v2119
        %2933 = vmatpush2.bf16.msra.mxu0 %v2118
        %2934 = vmatprep.subr.bf16.mxu0 %v2117
        %2935 = vmatpush2.bf16.msra.mxu0 %v2116
        %2936 = vmatprep.mubr.bf16.mxu0 %v781
        %2937 = vmatmul.mubr.bf16.gmra.mxu0 %v780
        %v2938 = vpop.f32.mrf.mxu0
        %v2939 = vadd.f32 %v2898, %v2938
        %v2940 = vpop.f32.mrf.mxu0
        %v2941 = vadd.f32 %v2900, %v2940
        %v2942 = vpop.f32.mrf.mxu0
        %v2943 = vpop.f32.mrf.mxu0
        %2944 = vdwg.mxu0
        %2945 = vmatprep.subr.bf16.mxu0 %v2147
        %2946 = vmatpush1.bf16.msra.mxu0 %v2146
        %2947 = vmatprep.subr.bf16.mxu0 %v2145
        %2948 = vmatpush1.bf16.msra.mxu0 %v2144
        %2949 = vmatprep.subr.bf16.mxu0 %v2143
        %2950 = vmatpush1.bf16.msra.mxu0 %v2142
        %2951 = vmatprep.subr.bf16.mxu0 %v2141
        %2952 = vmatpush1.bf16.msra.mxu0 %v2140
        %2953 = vmatprep.subr.bf16.mxu0 %v2139
        %2954 = vmatpush1.bf16.msra.mxu0 %v2138
        %2955 = vmatprep.subr.bf16.mxu0 %v2137
        %2956 = vmatpush1.bf16.msra.mxu0 %v2136
        %2957 = vmatprep.subr.bf16.mxu0 %v2135
        %2958 = vmatpush1.bf16.msra.mxu0 %v2134
        %2959 = vmatprep.subr.bf16.mxu0 %v2133
        %2960 = vmatpush1.bf16.msra.mxu0 %v2132
        %2961 = vmatprep.subr.bf16.mxu0 %v2163
        %2962 = vmatpush2.bf16.msra.mxu0 %v2162
        %2963 = vmatprep.subr.bf16.mxu0 %v2161
        %2964 = vmatpush2.bf16.msra.mxu0 %v2160
        %2965 = vmatprep.subr.bf16.mxu0 %v2159
        %2966 = vmatpush2.bf16.msra.mxu0 %v2158
        %2967 = vmatprep.subr.bf16.mxu0 %v2157
        %2968 = vmatpush2.bf16.msra.mxu0 %v2156
        %2969 = vmatprep.subr.bf16.mxu0 %v2155
        %2970 = vmatpush2.bf16.msra.mxu0 %v2154
        %2971 = vmatprep.subr.bf16.mxu0 %v2153
        %2972 = vmatpush2.bf16.msra.mxu0 %v2152
        %2973 = vmatprep.subr.bf16.mxu0 %v2151
        %2974 = vmatpush2.bf16.msra.mxu0 %v2150
        %2975 = vmatprep.subr.bf16.mxu0 %v2149
        %2976 = vmatpush2.bf16.msra.mxu0 %v2148
        %2977 = vmatprep.mubr.bf16.mxu0 %v783
        %2978 = vmatmul.mubr.bf16.gmra.mxu0 %v782
        %v2979 = vpop.f32.mrf.mxu0
        %v2980 = vadd.f32 %v2939, %v2979
        %v2981 = vpop.f32.mrf.mxu0
        %v2982 = vadd.f32 %v2941, %v2981
        %v2983 = vpop.f32.mrf.mxu0
        %v2984 = vpop.f32.mrf.mxu0
        %2985 = vdwg.mxu0
        %2986 = vmatprep.subr.bf16.mxu0 %v2179
        %2987 = vmatpush1.bf16.msra.mxu0 %v2178
        %2988 = vmatprep.subr.bf16.mxu0 %v2177
        %2989 = vmatpush1.bf16.msra.mxu0 %v2176
        %2990 = vmatprep.subr.bf16.mxu0 %v2175
        %2991 = vmatpush1.bf16.msra.mxu0 %v2174
        %2992 = vmatprep.subr.bf16.mxu0 %v2173
        %2993 = vmatpush1.bf16.msra.mxu0 %v2172
        %2994 = vmatprep.subr.bf16.mxu0 %v2171
        %2995 = vmatpush1.bf16.msra.mxu0 %v2170
        %2996 = vmatprep.subr.bf16.mxu0 %v2169
        %2997 = vmatpush1.bf16.msra.mxu0 %v2168
        %2998 = vmatprep.subr.bf16.mxu0 %v2167
        %2999 = vmatpush1.bf16.msra.mxu0 %v2166
        %3000 = vmatprep.subr.bf16.mxu0 %v2165
        %3001 = vmatpush1.bf16.msra.mxu0 %v2164
        %3002 = vmatprep.subr.bf16.mxu0 %v2195
        %3003 = vmatpush2.bf16.msra.mxu0 %v2194
        %3004 = vmatprep.subr.bf16.mxu0 %v2193
        %3005 = vmatpush2.bf16.msra.mxu0 %v2192
        %3006 = vmatprep.subr.bf16.mxu0 %v2191
        %3007 = vmatpush2.bf16.msra.mxu0 %v2190
        %3008 = vmatprep.subr.bf16.mxu0 %v2189
        %3009 = vmatpush2.bf16.msra.mxu0 %v2188
        %3010 = vmatprep.subr.bf16.mxu0 %v2187
        %3011 = vmatpush2.bf16.msra.mxu0 %v2186
        %3012 = vmatprep.subr.bf16.mxu0 %v2185
        %3013 = vmatpush2.bf16.msra.mxu0 %v2184
        %3014 = vmatprep.subr.bf16.mxu0 %v2183
        %3015 = vmatpush2.bf16.msra.mxu0 %v2182
        %3016 = vmatprep.subr.bf16.mxu0 %v2181
        %3017 = vmatpush2.bf16.msra.mxu0 %v2180
        %3018 = vmatprep.mubr.bf16.mxu0 %v785
        %3019 = vmatmul.mubr.bf16.gmra.mxu0 %v784
        %v3020 = vpop.f32.mrf.mxu0
        %v3021 = vadd.f32 %v2980, %v3020
        %v3022 = vpop.f32.mrf.mxu0
        %v3023 = vadd.f32 %v2982, %v3022
        %v3024 = vpop.f32.mrf.mxu0
        %v3025 = vpop.f32.mrf.mxu0
        %3026 = vdwg.mxu0
        %3027 = vmatprep.subr.bf16.mxu0 %v2211
        %3028 = vmatpush1.bf16.msra.mxu0 %v2210
        %3029 = vmatprep.subr.bf16.mxu0 %v2209
        %3030 = vmatpush1.bf16.msra.mxu0 %v2208
        %3031 = vmatprep.subr.bf16.mxu0 %v2207
        %3032 = vmatpush1.bf16.msra.mxu0 %v2206
        %3033 = vmatprep.subr.bf16.mxu0 %v2205
        %3034 = vmatpush1.bf16.msra.mxu0 %v2204
        %3035 = vmatprep.subr.bf16.mxu0 %v2203
        %3036 = vmatpush1.bf16.msra.mxu0 %v2202
        %3037 = vmatprep.subr.bf16.mxu0 %v2201
        %3038 = vmatpush1.bf16.msra.mxu0 %v2200
        %3039 = vmatprep.subr.bf16.mxu0 %v2199
        %3040 = vmatpush1.bf16.msra.mxu0 %v2198
        %3041 = vmatprep.subr.bf16.mxu0 %v2197
        %3042 = vmatpush1.bf16.msra.mxu0 %v2196
        %3043 = vmatprep.subr.bf16.mxu0 %v2227
        %3044 = vmatpush2.bf16.msra.mxu0 %v2226
        %3045 = vmatprep.subr.bf16.mxu0 %v2225
        %3046 = vmatpush2.bf16.msra.mxu0 %v2224
        %3047 = vmatprep.subr.bf16.mxu0 %v2223
        %3048 = vmatpush2.bf16.msra.mxu0 %v2222
        %3049 = vmatprep.subr.bf16.mxu0 %v2221
        %3050 = vmatpush2.bf16.msra.mxu0 %v2220
        %3051 = vmatprep.subr.bf16.mxu0 %v2219
        %3052 = vmatpush2.bf16.msra.mxu0 %v2218
        %3053 = vmatprep.subr.bf16.mxu0 %v2217
        %3054 = vmatpush2.bf16.msra.mxu0 %v2216
        %3055 = vmatprep.subr.bf16.mxu0 %v2215
        %3056 = vmatpush2.bf16.msra.mxu0 %v2214
        %3057 = vmatprep.subr.bf16.mxu0 %v2213
        %3058 = vmatpush2.bf16.msra.mxu0 %v2212
        %3059 = vmatprep.mubr.bf16.mxu0 %v787
        %3060 = vmatmul.mubr.bf16.gmra.mxu0 %v786
        %v3061 = vpop.f32.mrf.mxu0
        %v3062 = vadd.f32 %v3021, %v3061
        %v3063 = vpop.f32.mrf.mxu0
        %v3064 = vadd.f32 %v3023, %v3063
        %v3065 = vpop.f32.mrf.mxu0
        %v3066 = vpop.f32.mrf.mxu0
        %3067 = vdwg.mxu0
        %3068 = vmatprep.subr.bf16.mxu0 %v2243
        %3069 = vmatpush1.bf16.msra.mxu0 %v2242
        %3070 = vmatprep.subr.bf16.mxu0 %v2241
        %3071 = vmatpush1.bf16.msra.mxu0 %v2240
        %3072 = vmatprep.subr.bf16.mxu0 %v2239
        %3073 = vmatpush1.bf16.msra.mxu0 %v2238
        %3074 = vmatprep.subr.bf16.mxu0 %v2237
        %3075 = vmatpush1.bf16.msra.mxu0 %v2236
        %3076 = vmatprep.subr.bf16.mxu0 %v2235
        %3077 = vmatpush1.bf16.msra.mxu0 %v2234
        %3078 = vmatprep.subr.bf16.mxu0 %v2233
        %3079 = vmatpush1.bf16.msra.mxu0 %v2232
        %3080 = vmatprep.subr.bf16.mxu0 %v2231
        %3081 = vmatpush1.bf16.msra.mxu0 %v2230
        %3082 = vmatprep.subr.bf16.mxu0 %v2229
        %3083 = vmatpush1.bf16.msra.mxu0 %v2228
        %3084 = vmatprep.subr.bf16.mxu0 %v2259
        %3085 = vmatpush2.bf16.msra.mxu0 %v2258
        %3086 = vmatprep.subr.bf16.mxu0 %v2257
        %3087 = vmatpush2.bf16.msra.mxu0 %v2256
        %3088 = vmatprep.subr.bf16.mxu0 %v2255
        %3089 = vmatpush2.bf16.msra.mxu0 %v2254
        %3090 = vmatprep.subr.bf16.mxu0 %v2253
        %3091 = vmatpush2.bf16.msra.mxu0 %v2252
        %3092 = vmatprep.subr.bf16.mxu0 %v2251
        %3093 = vmatpush2.bf16.msra.mxu0 %v2250
        %3094 = vmatprep.subr.bf16.mxu0 %v2249
        %3095 = vmatpush2.bf16.msra.mxu0 %v2248
        %3096 = vmatprep.subr.bf16.mxu0 %v2247
        %3097 = vmatpush2.bf16.msra.mxu0 %v2246
        %3098 = vmatprep.subr.bf16.mxu0 %v2245
        %3099 = vmatpush2.bf16.msra.mxu0 %v2244
        %3100 = vmatprep.mubr.bf16.mxu0 %v789
        %3101 = vmatmul.mubr.bf16.gmra.mxu0 %v788
        %v3102 = vpop.f32.mrf.mxu0
        %v3103 = vadd.f32 %v3062, %v3102
        %v3104 = vpop.f32.mrf.mxu0
        %v3105 = vadd.f32 %v3064, %v3104
        %v3106 = vpop.f32.mrf.mxu0
        %v3107 = vpop.f32.mrf.mxu0
        %3108 = vdwg.mxu0
        %3109 = vmatprep.subr.bf16.mxu0 %v2275
        %3110 = vmatpush1.bf16.msra.mxu0 %v2274
        %3111 = vmatprep.subr.bf16.mxu0 %v2273
        %3112 = vmatpush1.bf16.msra.mxu0 %v2272
        %3113 = vmatprep.subr.bf16.mxu0 %v2271
        %3114 = vmatpush1.bf16.msra.mxu0 %v2270
        %3115 = vmatprep.subr.bf16.mxu0 %v2269
        %3116 = vmatpush1.bf16.msra.mxu0 %v2268
        %3117 = vmatprep.subr.bf16.mxu0 %v2267
        %3118 = vmatpush1.bf16.msra.mxu0 %v2266
        %3119 = vmatprep.subr.bf16.mxu0 %v2265
        %3120 = vmatpush1.bf16.msra.mxu0 %v2264
        %3121 = vmatprep.subr.bf16.mxu0 %v2263
        %3122 = vmatpush1.bf16.msra.mxu0 %v2262
        %3123 = vmatprep.subr.bf16.mxu0 %v2261
        %3124 = vmatpush1.bf16.msra.mxu0 %v2260
        %3125 = vmatprep.subr.bf16.mxu0 %v2291
        %3126 = vmatpush2.bf16.msra.mxu0 %v2290
        %3127 = vmatprep.subr.bf16.mxu0 %v2289
        %3128 = vmatpush2.bf16.msra.mxu0 %v2288
        %3129 = vmatprep.subr.bf16.mxu0 %v2287
        %3130 = vmatpush2.bf16.msra.mxu0 %v2286
        %3131 = vmatprep.subr.bf16.mxu0 %v2285
        %3132 = vmatpush2.bf16.msra.mxu0 %v2284
        %3133 = vmatprep.subr.bf16.mxu0 %v2283
        %3134 = vmatpush2.bf16.msra.mxu0 %v2282
        %3135 = vmatprep.subr.bf16.mxu0 %v2281
        %3136 = vmatpush2.bf16.msra.mxu0 %v2280
        %3137 = vmatprep.subr.bf16.mxu0 %v2279
        %3138 = vmatpush2.bf16.msra.mxu0 %v2278
        %3139 = vmatprep.subr.bf16.mxu0 %v2277
        %3140 = vmatpush2.bf16.msra.mxu0 %v2276
        %3141 = vmatprep.mubr.bf16.mxu0 %v791
        %3142 = vmatmul.mubr.bf16.gmra.mxu0 %v790
        %v3143 = vpop.f32.mrf.mxu0
        %v3144 = vadd.f32 %v3103, %v3143
        %v3145 = vpop.f32.mrf.mxu0
        %v3146 = vadd.f32 %v3105, %v3145
        %v3147 = vpop.f32.mrf.mxu0
        %v3148 = vpop.f32.mrf.mxu0
        %3149 = vdwg.mxu0
        %3150 = vmatprep.subr.bf16.mxu0 %v2307
        %3151 = vmatpush1.bf16.msra.mxu0 %v2306
        %3152 = vmatprep.subr.bf16.mxu0 %v2305
        %3153 = vmatpush1.bf16.msra.mxu0 %v2304
        %3154 = vmatprep.subr.bf16.mxu0 %v2303
        %3155 = vmatpush1.bf16.msra.mxu0 %v2302
        %3156 = vmatprep.subr.bf16.mxu0 %v2301
        %3157 = vmatpush1.bf16.msra.mxu0 %v2300
        %3158 = vmatprep.subr.bf16.mxu0 %v2299
        %3159 = vmatpush1.bf16.msra.mxu0 %v2298
        %3160 = vmatprep.subr.bf16.mxu0 %v2297
        %3161 = vmatpush1.bf16.msra.mxu0 %v2296
        %3162 = vmatprep.subr.bf16.mxu0 %v2295
        %3163 = vmatpush1.bf16.msra.mxu0 %v2294
        %3164 = vmatprep.subr.bf16.mxu0 %v2293
        %3165 = vmatpush1.bf16.msra.mxu0 %v2292
        %3166 = vmatprep.subr.bf16.mxu0 %v2323
        %3167 = vmatpush2.bf16.msra.mxu0 %v2322
        %3168 = vmatprep.subr.bf16.mxu0 %v2321
        %3169 = vmatpush2.bf16.msra.mxu0 %v2320
        %3170 = vmatprep.subr.bf16.mxu0 %v2319
        %3171 = vmatpush2.bf16.msra.mxu0 %v2318
        %3172 = vmatprep.subr.bf16.mxu0 %v2317
        %3173 = vmatpush2.bf16.msra.mxu0 %v2316
        %3174 = vmatprep.subr.bf16.mxu0 %v2315
        %3175 = vmatpush2.bf16.msra.mxu0 %v2314
        %3176 = vmatprep.subr.bf16.mxu0 %v2313
        %3177 = vmatpush2.bf16.msra.mxu0 %v2312
        %3178 = vmatprep.subr.bf16.mxu0 %v2311
        %3179 = vmatpush2.bf16.msra.mxu0 %v2310
        %3180 = vmatprep.subr.bf16.mxu0 %v2309
        %3181 = vmatpush2.bf16.msra.mxu0 %v2308
        %3182 = vmatprep.mubr.bf16.mxu0 %v793
        %3183 = vmatmul.mubr.bf16.gmra.mxu0 %v792
        %v3184 = vpop.f32.mrf.mxu0
        %v3185 = vadd.f32 %v3144, %v3184
        %v3186 = vpop.f32.mrf.mxu0
        %v3187 = vadd.f32 %v3146, %v3186
        %v3188 = vpop.f32.mrf.mxu0
        %v3189 = vpop.f32.mrf.mxu0
        %3190 = vdwg.mxu0
        %3191 = vmatprep.subr.bf16.mxu0 %v2339
        %3192 = vmatpush1.bf16.msra.mxu0 %v2338
        %3193 = vmatprep.subr.bf16.mxu0 %v2337
        %3194 = vmatpush1.bf16.msra.mxu0 %v2336
        %3195 = vmatprep.subr.bf16.mxu0 %v2335
        %3196 = vmatpush1.bf16.msra.mxu0 %v2334
        %3197 = vmatprep.subr.bf16.mxu0 %v2333
        %3198 = vmatpush1.bf16.msra.mxu0 %v2332
        %3199 = vmatprep.subr.bf16.mxu0 %v2331
        %3200 = vmatpush1.bf16.msra.mxu0 %v2330
        %3201 = vmatprep.subr.bf16.mxu0 %v2329
        %3202 = vmatpush1.bf16.msra.mxu0 %v2328
        %3203 = vmatprep.subr.bf16.mxu0 %v2327
        %3204 = vmatpush1.bf16.msra.mxu0 %v2326
        %3205 = vmatprep.subr.bf16.mxu0 %v2325
        %3206 = vmatpush1.bf16.msra.mxu0 %v2324
        %3207 = vmatprep.subr.bf16.mxu0 %v2355
        %3208 = vmatpush2.bf16.msra.mxu0 %v2354
        %3209 = vmatprep.subr.bf16.mxu0 %v2353
        %3210 = vmatpush2.bf16.msra.mxu0 %v2352
        %3211 = vmatprep.subr.bf16.mxu0 %v2351
        %3212 = vmatpush2.bf16.msra.mxu0 %v2350
        %3213 = vmatprep.subr.bf16.mxu0 %v2349
        %3214 = vmatpush2.bf16.msra.mxu0 %v2348
        %3215 = vmatprep.subr.bf16.mxu0 %v2347
        %3216 = vmatpush2.bf16.msra.mxu0 %v2346
        %3217 = vmatprep.subr.bf16.mxu0 %v2345
        %3218 = vmatpush2.bf16.msra.mxu0 %v2344
        %3219 = vmatprep.subr.bf16.mxu0 %v2343
        %3220 = vmatpush2.bf16.msra.mxu0 %v2342
        %3221 = vmatprep.subr.bf16.mxu0 %v2341
        %3222 = vmatpush2.bf16.msra.mxu0 %v2340
        %3223 = vmatprep.mubr.bf16.mxu0 %v795
        %3224 = vmatmul.mubr.bf16.gmra.mxu0 %v794
        %v3225 = vpop.f32.mrf.mxu0
        %v3226 = vadd.f32 %v3185, %v3225
        %v3227 = vpop.f32.mrf.mxu0
        %v3228 = vadd.f32 %v3187, %v3227
        %v3229 = vpop.f32.mrf.mxu0
        %v3230 = vpop.f32.mrf.mxu0
        %3231 = vdwg.mxu0
        %v3232 = vadd.f32 %v338, %v3226
        %v3233 = vadd.f32 %v339, %v3228
        %3234 = vst [vmem:[#allocation2] sm:$0xff] %v3232
        %3235 = vst [vmem:[#allocation2 + $0x8] sm:$0xff] %v3233
        %p3236 = scmp.eq.s32.totalorder %s26, 1
        // Predicated region
        $region53: #{net_forward.1} parent=35 // pred_check
          %p3237 = pneg %p3236
        $region54: #{net_forward.1} parent=35 // pred_check_branch
          %3239 = sbr.rel (%p3237) target = $region56
        $region55: #{net_forward.1} parent=35 // pred_region
          %v3240 = vld [vmem:[#allocation2] sm:$0xff]
          %v3241 = vld [vmem:[#allocation2 + $0x8] sm:$0xff]
          %v3242 = vld [vmem:[%s270] sm:$0x3]
          %v3244 = vlaneseq
          %v3245 = vshrl.u32 %v3244, 7
          %v3246 = vsub.s32 0, %v3245
          %v3247 = vrot.slane %v3242, %v3246
          %v3248 = vlaneseq
          %v3249 = vshrl.u32 %v3248, 7
          %v3250 = vsub.s32 1, %v3249
          %v3251 = vrot.slane %v3242, %v3250
          %v3254 = vadd.f32 %v3240, %v3247
          %v3255 = vadd.f32 %v3241, %v3251
          %v3256 = vxor.u32 %v3254, 2147483648
          %v3257 = vxor.u32 %v3255, 2147483648
          %v3258 = vmul.f32 %v3256, 1.442695
          %v3259 = vpow.pop %v3258
          %v3260 = vmul.f32 %v3257, 1.442695
          %v3261 = vpow.pop %v3260
          %v3262 = vadd.f32 %v3259, 1.0
          %v3263 = vadd.f32 %v3261, 1.0
          %v3264 = vrcp.pop %v3262
          %v3265 = vmul.f32 1.0, %v3264
          %v3266 = vrcp.pop %v3263
          %v3267 = vmul.f32 1.0, %v3266
          %v3268 = vld [vmem:[%s279] sm:$0x3]
          %v3270 = vlaneseq
          %v3271 = vshrl.u32 %v3270, 7
          %v3272 = vsub.s32 0, %v3271
          %v3273 = vrot.slane %v3268, %v3272
          %v3274 = vlaneseq
          %v3275 = vshrl.u32 %v3274, 7
          %v3276 = vsub.s32 1, %v3275
          %v3277 = vrot.slane %v3268, %v3276
          %v3280 = vmul.f32 %v3265, %v3273
          %v3281 = vmul.f32 %v3267, %v3277
          %v3282 = vadd.f32 %v3280, %v3281
          %3283 = vadd.xlane.f32.xlu0 %v3282
          %v3284 = vpop.xlane.xlu0 %3283
          %vm3285 = vcmask 7168
          %3286 = vst.msk [vmem:[%s331] sm:$0xff] %vm3285, %v3284
        $region56: #{net_forward.1} parent=35 // pred_fallthru
          _
        %p3287 = scmp.lt.s32.totalorder %s25, 1
        %s3288 = scalar_select %p3287, %s25, 1
        %s3289 = smul.addr %s3288, 8
        %s3290 = scalar_lea.vmem %s4, %s3289
        // Predicated region
        $region57: #{net_forward.1} parent=35 // pred_check
          %p3291 = pneg %p157
        $region58: #{net_forward.1} parent=35 // pred_check_branch
          %3293 = sbr.rel (%p3291) target = $region60
        $region59: #{net_forward.1} parent=35 // pred_region
          _
        $region60: #{net_forward.1} parent=35 // pred_fallthru
          _
      $region36: #{net_forward.1} parent=5 // pred_fallthru
        _
      %p3294 = scmp.le.s32.totalorder 2, %s16
      // Predicated region
      $region61: #{net_forward.1} parent=5 // pred_check
        %p3295 = pneg %p3294
      $region62: #{net_forward.1} parent=5 // pred_check_branch
        %3297 = sbr.rel (%p3295) target = $region64
      $region63: #{net_forward.1} parent=5 // pred_region
        %s3298 = ssub.s32 %s16, 2
        // Predicated region
        $region65: #{net_forward.1} parent=63 // pred_check
          %p3299 = pneg %p163
        $region66: #{net_forward.1} parent=63 // pred_check_branch
          %3301 = sbr.rel (%p3299) target = $region68
        $region67: #{net_forward.1} parent=63 // pred_region
          %p3302 = scmp.lt.s32.totalorder %s27, 1
          %s3303 = scalar_select %p3302, %s27, 1
          %s3304 = smul.addr %s3303, 8
          %s3305 = scalar_lea.vmem %s4, %s3304
        $region68: #{net_forward.1} parent=63 // pred_fallthru
          _
      $region64: #{net_forward.1} parent=5 // pred_fallthru
        _
    $region6: #{net_forward.1} parent=1 // loop_footer
      %s20 = sadd.s32 1, %s16
    $region7: #{net_forward.1} parent=1 // loop_footer_branch
      %15 = sbr.rel target = $region3
    $region8: #{net_forward.1} parent=1 // loop_exit
      _
    %3306 = vsyncpa [#allocation4], 1
    %s3307 = scalar_lea.sflag [#allocation4], 1
    %3308 = vsyncpa %s3307, 1
    %3309 = vsyncpa [#allocation6], 1
    %s3310 = scalar_lea.sflag [#allocation6], 1
    %3311 = vsyncpa %s3310, 1

</llo_original>
